<compile_context>
chip_gen: v7x
topology: tpu7x:2x2x1
jax: 0.10.0
libtpu: 0.0.40
codegen_flags: <defaults>
</compile_context>

<pallas_src>
import math

import jax
import jax.numpy as jnp
import numpy as np
from jax import lax
from jax.experimental import pallas as pl
from jax.experimental.pallas import tpu as pltpu


def _bce_with_logits(x, y):
    # numerically-stable elementwise BCE-with-logits (matches
    # torch.nn.BCEWithLogitsLoss before the mean reduction).
    return jnp.maximum(x, 0.0) - x * y + jnp.log1p(jnp.exp(-jnp.abs(x)))


def cause_kernel(user_col_ref, item_col_ref, item_row_ref, label_ref, mask_ref,
                 users_ref, items_c_ref, items_t_ref, out_ref):
    BS = user_col_ref.shape[0]          # flattened batch*seq
    U, E = users_ref.shape
    I = items_c_ref.shape[0]
    B = mask_ref.shape[1]
    S = BS // B

    u_idx = user_col_ref[...]           # (BS, 1) int32
    i_idx = item_col_ref[...]           # (BS, 1) int32
    i_row = item_row_ref[...]           # (1, BS) int32
    label = label_ref[...]              # (BS, 1) f32

    # ---- in-kernel embedding gathers: one-hot @ table on the MXU ----------
    oh_u = (lax.broadcasted_iota(jnp.int32, (BS, U), 1) == u_idx).astype(jnp.float32)
    oh_i = (lax.broadcasted_iota(jnp.int32, (BS, I), 1) == i_idx).astype(jnp.float32)
    u = jnp.dot(oh_u, users_ref[...], preferred_element_type=jnp.float32)    # (BS, E)
    ic = jnp.dot(oh_i, items_c_ref[...], preferred_element_type=jnp.float32)  # (BS, E)
    it = jnp.dot(oh_i, items_t_ref[...], preferred_element_type=jnp.float32)  # (BS, E)

    # ---- expand (B,) mask to per-example weights: m[k] = mask[k // S] ------
    # (range comparisons instead of integer division for safe lowering)
    row_i = lax.broadcasted_iota(jnp.int32, (BS, B), 0)
    col_i = lax.broadcasted_iota(jnp.int32, (BS, B), 1)
    seg = (row_i >= col_i * S) & (row_i < (col_i + 1) * S)       # (BS, B) one-hot over batch
    m = jnp.sum(jnp.where(seg, mask_ref[...], 0.0), axis=1, keepdims=True)   # (BS, 1)

    # ---- factual scores / losses ------------------------------------------
    score_c = jnp.sum(u * ic, axis=1, keepdims=True)             # (BS, 1)
    score_t = jnp.sum(u * it, axis=1, keepdims=True)             # (BS, 1)

    w_c = 1.0 - m
    w_t = m
    n_c = jnp.sum(w_c, keepdims=True)                            # (1, 1)
    n_t = jnp.sum(w_t, keepdims=True)                            # (1, 1)
    # Exact reciprocals (no approx); the max(., 1) guard only matters for the
    # degenerate all-True / all-False mask case (where the torch reference is NaN).
    inv_nc = 1.0 / jnp.maximum(n_c, 1.0)
    inv_nt = 1.0 / jnp.maximum(n_t, 1.0)

    control_loss = jnp.sum(_bce_with_logits(score_c, label) * w_c, keepdims=True) * inv_nc
    treatment_loss = jnp.sum(_bce_with_logits(score_t, label) * w_t, keepdims=True) * inv_nt
    control_dist = jnp.sum(jnp.abs(jax.nn.sigmoid(score_c) - label) * w_c, keepdims=True) * inv_nc
    treatment_dist = jnp.sum(jnp.abs(jax.nn.sigmoid(score_t) - label) * w_t, keepdims=True) * inv_nt

    # ---- counterfactual discrepancy over the unique items in the batch -----
    # presence[i] = 1 iff item i occurs anywhere in the batch (== torch.unique(item))
    oh_items_t = lax.broadcasted_iota(jnp.int32, (I, BS), 0) == i_row        # (I, BS)
    presence = jnp.max(oh_items_t.astype(jnp.float32), axis=1, keepdims=True)  # (I, 1)
    cnt = jnp.sum(presence, keepdims=True)                                   # (1, 1)
    diff = items_c_ref[...] - items_t_ref[...]                               # (I, E)
    disc = jnp.sum(diff * diff * presence, keepdims=True) / (jnp.maximum(cnt, 1.0) * float(E))

    # ---- pack the 5 scalars into one lane-dense output row (single DMA) ----
    lane = lax.broadcasted_iota(jnp.int32, (1, 128), 1)
    out = (jnp.where(lane == 0, control_loss, 0.0)
           + jnp.where(lane == 1, treatment_loss, 0.0)
           + jnp.where(lane == 2, disc, 0.0)
           + jnp.where(lane == 3, control_dist, 0.0)
           + jnp.where(lane == 4, treatment_dist, 0.0))
    out_ref[...] = out


@jax.jit
def cause_forward(params, user, item, label, mask):
    users, items_control, items_treatment = params
    B, S = user.shape
    BS = B * S
    U, E = users.shape
    I = items_control.shape[0]

    # Layout plumbing only (no gathers / scatters / repeats in XLA).
    user_col = user.astype(jnp.int32).reshape(BS, 1)
    item_col = item.astype(jnp.int32).reshape(BS, 1)
    item_row = item.astype(jnp.int32).reshape(1, BS)
    label_col = label.astype(jnp.float32).reshape(BS, 1)
    mask_row = mask.astype(jnp.float32).reshape(1, B)

    vmem = pl.BlockSpec(memory_space=pltpu.MemorySpace.VMEM)
    in_bytes = 4 * (user_col.size + item_col.size + item_row.size
                    + label_col.size + mask_row.size
                    + users.size + items_control.size + items_treatment.size)
    cost = pl.CostEstimate(
        flops=2 * BS * E * (U + 2 * I) + 16 * BS * E + 4 * I * E,
        transcendentals=4 * BS,
        bytes_accessed=in_bytes + 4 * 128,
    )
    # No grid: everything fits in VMEM trivially at these sizes (single TC).
    # TODO(synk): if B*S scales up, add a "parallel" grid over the flattened
    # example axis so both TensorCores on v7x are used.
    out = pl.pallas_call(
        cause_kernel,
        out_shape=jax.ShapeDtypeStruct((1, 128), jnp.float32),
        in_specs=[vmem] * 8,
        out_specs=vmem,
        cost_estimate=cost,
    )(user_col, item_col, item_row, label_col, mask_row,
      users, items_control, items_treatment)

    return out[0, 0], out[0, 1], out[0, 2], out[0, 3], out[0, 4]


def ref_numpy(users, items_c, items_t, user, item, label, mask):
    users, items_c, items_t = map(np.asarray, (users, items_c, items_t))
    user, item = np.asarray(user), np.asarray(item)
    label, mask = np.asarray(label, np.float32), np.asarray(mask, bool)

    def bce(x, y):
        return np.mean(np.maximum(x, 0.0) - x * y + np.log1p(np.exp(-np.abs(x))))

    def sig(x):
        return 1.0 / (1.0 + np.exp(-x))

    nm = ~mask
    sc = np.sum(users[user[nm]] * items_c[item[nm]], axis=2)
    lc = label[nm]
    control_loss = bce(sc, lc)
    control_dist = np.mean(np.abs(sig(sc) - lc))

    st = np.sum(users[user[mask]] * items_t[item[mask]], axis=2)
    lt = label[mask]
    treatment_loss = bce(st, lt)
    treatment_dist = np.mean(np.abs(sig(st) - lt))

    uniq = np.unique(item)
    disc = np.mean((items_c[uniq] - items_t[uniq]) ** 2)
    return np.array([control_loss, treatment_loss, disc,
                     control_dist, treatment_dist], np.float32)


if __name__ == "__main__":
    num_users, num_items, E = 64, 48, 32
    B, S = 8, 8

    stdv = 1.0 / math.sqrt(E)
    key = jax.random.PRNGKey(0)
    k1, k2, k3, k4, k5, k6 = jax.random.split(key, 6)
    users = jax.random.uniform(k1, (num_users, E), jnp.float32, -stdv, stdv)
    items_control = jax.random.uniform(k2, (num_items, E), jnp.float32, -stdv, stdv)
    items_treatment = jax.random.uniform(k3, (num_items, E), jnp.float32, -stdv, stdv)

    user = jax.random.randint(k4, (B, S), 0, num_users, dtype=jnp.int32)
    item = jax.random.randint(k5, (B, S), 0, num_items, dtype=jnp.int32)
    label = jax.random.bernoulli(k6, 0.5, (B, S)).astype(jnp.float32)
    mask = jnp.array([False, True, False, True, True, False, False, True])

    params = (users, items_control, items_treatment)
    outs = cause_forward(params, user, item, label, mask)
    outs = jax.block_until_ready(outs)

    got = np.array([float(o) for o in outs], np.float32)
    want = ref_numpy(users, items_control, items_treatment, user, item, label, mask)
    np.testing.assert_allclose(got, want, rtol=2e-4, atol=2e-5)
    print("KERNEL_OK")
</pallas_src>

<mosaic_0001>
module attributes {stable_mosaic.version = 11 : i64} {
  func.func @cause_kernel(%arg0: memref<64x1xi32, #tpu.memory_space<vmem>>, %arg1: memref<64x1xi32, #tpu.memory_space<vmem>>, %arg2: memref<1x64xi32, #tpu.memory_space<vmem>>, %arg3: memref<64x1xf32, #tpu.memory_space<vmem>>, %arg4: memref<1x8xf32, #tpu.memory_space<vmem>>, %arg5: memref<64x32xf32, #tpu.memory_space<vmem>>, %arg6: memref<48x32xf32, #tpu.memory_space<vmem>>, %arg7: memref<48x32xf32, #tpu.memory_space<vmem>>, %arg8: memref<1x128xf32, #tpu.memory_space<vmem>>) attributes {dimension_semantics = [], scalar_prefetch = 0 : i64, scratch_operands = 0 : i64, tpu.core_type = #tpu.core_type<tc>} {
    %c0 = arith.constant 0 : index
    %c0_0 = arith.constant 0 : index
    %0 = vector.load %arg0[%c0, %c0_0] : memref<64x1xi32, #tpu.memory_space<vmem>>, vector<64x1xi32>
    %c0_1 = arith.constant 0 : index
    %c0_2 = arith.constant 0 : index
    %1 = vector.load %arg1[%c0_1, %c0_2] : memref<64x1xi32, #tpu.memory_space<vmem>>, vector<64x1xi32>
    %c0_3 = arith.constant 0 : index
    %c0_4 = arith.constant 0 : index
    %2 = vector.load %arg2[%c0_3, %c0_4] : memref<1x64xi32, #tpu.memory_space<vmem>>, vector<1x64xi32>
    %c0_5 = arith.constant 0 : index
    %c0_6 = arith.constant 0 : index
    %3 = vector.load %arg3[%c0_5, %c0_6] : memref<64x1xf32, #tpu.memory_space<vmem>>, vector<64x1xf32>
    %4 = tpu.iota {dimensions = array<i32: 1>} : vector<64x64xi32>
    %5 = vector.broadcast %0 : vector<64x1xi32> to vector<64x64xi32>
    %6 = arith.cmpi eq, %4, %5 : vector<64x64xi32>
    %7 = arith.extui %6 : vector<64x64xi1> to vector<64x64xi32>
    %8 = arith.sitofp %7 : vector<64x64xi32> to vector<64x64xf32>
    %9 = tpu.iota {dimensions = array<i32: 1>} : vector<64x48xi32>
    %10 = vector.broadcast %1 : vector<64x1xi32> to vector<64x48xi32>
    %11 = arith.cmpi eq, %9, %10 : vector<64x48xi32>
    %12 = arith.extui %11 : vector<64x48xi1> to vector<64x48xi32>
    %13 = arith.sitofp %12 : vector<64x48xi32> to vector<64x48xf32>
    %c0_7 = arith.constant 0 : index
    %c0_8 = arith.constant 0 : index
    %14 = vector.load %arg5[%c0_7, %c0_8] : memref<64x32xf32, #tpu.memory_space<vmem>>, vector<64x32xf32>
    %cst = arith.constant dense<0.000000e+00> : vector<64x32xf32>
    %15 = tpu.matmul %8, %14, %cst {dimension_numbers = #tpu.dot_dimension_numbers<[1], [0], [0], [1], [0, 0, 1, 1], [], []>} : vector<64x64xf32>, vector<64x32xf32>, vector<64x32xf32> -> vector<64x32xf32>
    %c0_9 = arith.constant 0 : index
    %c0_10 = arith.constant 0 : index
    %16 = vector.load %arg6[%c0_9, %c0_10] : memref<48x32xf32, #tpu.memory_space<vmem>>, vector<48x32xf32>
    %cst_11 = arith.constant dense<0.000000e+00> : vector<64x32xf32>
    %17 = tpu.matmul %13, %16, %cst_11 {dimension_numbers = #tpu.dot_dimension_numbers<[1], [0], [0], [1], [0, 0, 1, 1], [], []>} : vector<64x48xf32>, vector<48x32xf32>, vector<64x32xf32> -> vector<64x32xf32>
    %c0_12 = arith.constant 0 : index
    %c0_13 = arith.constant 0 : index
    %18 = vector.load %arg7[%c0_12, %c0_13] : memref<48x32xf32, #tpu.memory_space<vmem>>, vector<48x32xf32>
    %cst_14 = arith.constant dense<0.000000e+00> : vector<64x32xf32>
    %19 = tpu.matmul %13, %18, %cst_14 {dimension_numbers = #tpu.dot_dimension_numbers<[1], [0], [0], [1], [0, 0, 1, 1], [], []>} : vector<64x48xf32>, vector<48x32xf32>, vector<64x32xf32> -> vector<64x32xf32>
    %20 = tpu.iota {dimensions = array<i32: 0>} : vector<64x8xi32>
    %21 = tpu.iota {dimensions = array<i32: 1>} : vector<64x8xi32>
    %c8_i32 = arith.constant 8 : i32
    %22 = vector.broadcast %c8_i32 : i32 to vector<64x8xi32>
    %23 = arith.muli %21, %22 : vector<64x8xi32>
    %24 = arith.cmpi sge, %20, %23 : vector<64x8xi32>
    %c1_i32 = arith.constant 1 : i32
    %25 = vector.broadcast %c1_i32 : i32 to vector<64x8xi32>
    %26 = arith.addi %21, %25 : vector<64x8xi32>
    %c8_i32_15 = arith.constant 8 : i32
    %27 = vector.broadcast %c8_i32_15 : i32 to vector<64x8xi32>
    %28 = arith.muli %26, %27 : vector<64x8xi32>
    %29 = arith.cmpi slt, %20, %28 : vector<64x8xi32>
    %30 = arith.andi %24, %29 : vector<64x8xi1>
    %c0_16 = arith.constant 0 : index
    %c0_17 = arith.constant 0 : index
    %31 = vector.load %arg4[%c0_16, %c0_17] : memref<1x8xf32, #tpu.memory_space<vmem>>, vector<1x8xf32>
    %cst_18 = arith.constant 0.000000e+00 : f32
    %32 = vector.shape_cast %31 : vector<1x8xf32> to vector<1x8xf32>
    %33 = vector.broadcast %32 : vector<1x8xf32> to vector<64x8xf32>
    %34 = vector.broadcast %cst_18 : f32 to vector<64x8xf32>
    %35 = arith.select %30, %33, %34 : vector<64x8xi1>, vector<64x8xf32>
    %cst_19 = arith.constant dense<0.000000e+00> : vector<64xf32>
    %36 = vector.multi_reduction <add>, %35, %cst_19 [1] : vector<64x8xf32> to vector<64xf32>
    %37 = vector.shape_cast %36 : vector<64xf32> to vector<64x1xf32>
    %38 = arith.mulf %15, %17 : vector<64x32xf32>
    %cst_20 = arith.constant dense<0.000000e+00> : vector<64xf32>
    %39 = vector.multi_reduction <add>, %38, %cst_20 [1] : vector<64x32xf32> to vector<64xf32>
    %40 = vector.shape_cast %39 : vector<64xf32> to vector<64x1xf32>
    %41 = arith.mulf %15, %19 : vector<64x32xf32>
    %cst_21 = arith.constant dense<0.000000e+00> : vector<64xf32>
    %42 = vector.multi_reduction <add>, %41, %cst_21 [1] : vector<64x32xf32> to vector<64xf32>
    %43 = vector.shape_cast %42 : vector<64xf32> to vector<64x1xf32>
    %cst_22 = arith.constant 1.000000e+00 : f32
    %44 = vector.broadcast %cst_22 : f32 to vector<64x1xf32>
    %45 = arith.subf %44, %37 : vector<64x1xf32>
    %46 = vector.shape_cast %45 : vector<64x1xf32> to vector<1x64x1xf32>
    %cst_23 = arith.constant dense<0.000000e+00> : vector<1xf32>
    %47 = vector.multi_reduction <add>, %46, %cst_23 [1, 2] : vector<1x64x1xf32> to vector<1xf32>
    %48 = vector.shape_cast %47 : vector<1xf32> to vector<1x1x1xf32>
    %49 = vector.extract %48[0, 0, 0] : f32 from vector<1x1x1xf32>
    %50 = vector.broadcast %49 : f32 to vector<1x1xf32>
    %51 = vector.shape_cast %37 : vector<64x1xf32> to vector<1x64x1xf32>
    %cst_24 = arith.constant dense<0.000000e+00> : vector<1xf32>
    %52 = vector.multi_reduction <add>, %51, %cst_24 [1, 2] : vector<1x64x1xf32> to vector<1xf32>
    %53 = vector.shape_cast %52 : vector<1xf32> to vector<1x1x1xf32>
    %54 = vector.extract %53[0, 0, 0] : f32 from vector<1x1x1xf32>
    %55 = vector.broadcast %54 : f32 to vector<1x1xf32>
    %cst_25 = arith.constant 1.000000e+00 : f32
    %56 = vector.broadcast %cst_25 : f32 to vector<1x1xf32>
    %57 = arith.maximumf %50, %56 : vector<1x1xf32>
    %cst_26 = arith.constant 1.000000e+00 : f32
    %58 = vector.broadcast %cst_26 : f32 to vector<1x1xf32>
    %59 = arith.divf %58, %57 : vector<1x1xf32>
    %cst_27 = arith.constant 1.000000e+00 : f32
    %60 = vector.broadcast %cst_27 : f32 to vector<1x1xf32>
    %61 = arith.maximumf %55, %60 : vector<1x1xf32>
    %cst_28 = arith.constant 1.000000e+00 : f32
    %62 = vector.broadcast %cst_28 : f32 to vector<1x1xf32>
    %63 = arith.divf %62, %61 : vector<1x1xf32>
    %cst_29 = arith.constant 0.000000e+00 : f32
    %64 = vector.broadcast %cst_29 : f32 to vector<64x1xf32>
    %65 = arith.maximumf %40, %64 : vector<64x1xf32>
    %66 = arith.mulf %40, %3 : vector<64x1xf32>
    %67 = arith.subf %65, %66 : vector<64x1xf32>
    %68 = math.absf %40 : vector<64x1xf32>
    %cst_30 = arith.constant 0.000000e+00 : f32
    %69 = vector.broadcast %cst_30 : f32 to vector<64x1xf32>
    %70 = arith.subf %69, %68 : vector<64x1xf32>
    %71 = math.exp %70 : vector<64x1xf32>
    %72 = math.log1p %71 : vector<64x1xf32>
    %73 = arith.addf %67, %72 : vector<64x1xf32>
    %74 = arith.mulf %73, %45 : vector<64x1xf32>
    %75 = vector.shape_cast %74 : vector<64x1xf32> to vector<1x64x1xf32>
    %cst_31 = arith.constant dense<0.000000e+00> : vector<1xf32>
    %76 = vector.multi_reduction <add>, %75, %cst_31 [1, 2] : vector<1x64x1xf32> to vector<1xf32>
    %77 = vector.shape_cast %76 : vector<1xf32> to vector<1x1x1xf32>
    %78 = vector.extract %77[0, 0, 0] : f32 from vector<1x1x1xf32>
    %79 = vector.broadcast %78 : f32 to vector<1x1xf32>
    %80 = arith.mulf %79, %59 : vector<1x1xf32>
    %cst_32 = arith.constant 0.000000e+00 : f32
    %81 = vector.broadcast %cst_32 : f32 to vector<64x1xf32>
    %82 = arith.maximumf %43, %81 : vector<64x1xf32>
    %83 = arith.mulf %43, %3 : vector<64x1xf32>
    %84 = arith.subf %82, %83 : vector<64x1xf32>
    %85 = math.absf %43 : vector<64x1xf32>
    %cst_33 = arith.constant 0.000000e+00 : f32
    %86 = vector.broadcast %cst_33 : f32 to vector<64x1xf32>
    %87 = arith.subf %86, %85 : vector<64x1xf32>
    %88 = math.exp %87 : vector<64x1xf32>
    %89 = math.log1p %88 : vector<64x1xf32>
    %90 = arith.addf %84, %89 : vector<64x1xf32>
    %91 = arith.mulf %90, %37 : vector<64x1xf32>
    %92 = vector.shape_cast %91 : vector<64x1xf32> to vector<1x64x1xf32>
    %cst_34 = arith.constant dense<0.000000e+00> : vector<1xf32>
    %93 = vector.multi_reduction <add>, %92, %cst_34 [1, 2] : vector<1x64x1xf32> to vector<1xf32>
    %94 = vector.shape_cast %93 : vector<1xf32> to vector<1x1x1xf32>
    %95 = vector.extract %94[0, 0, 0] : f32 from vector<1x1x1xf32>
    %96 = vector.broadcast %95 : f32 to vector<1x1xf32>
    %97 = arith.mulf %96, %63 : vector<1x1xf32>
    %98 = arith.negf %40 : vector<64x1xf32>
    %99 = math.exp %98 : vector<64x1xf32>
    %cst_35 = arith.constant 1.000000e+00 : f32
    %100 = vector.broadcast %cst_35 : f32 to vector<64x1xf32>
    %101 = arith.addf %100, %99 : vector<64x1xf32>
    %102 = arith.divf %100, %101 : vector<64x1xf32>
    %103 = arith.subf %102, %3 : vector<64x1xf32>
    %104 = math.absf %103 : vector<64x1xf32>
    %105 = arith.mulf %104, %45 : vector<64x1xf32>
    %106 = vector.shape_cast %105 : vector<64x1xf32> to vector<1x64x1xf32>
    %cst_36 = arith.constant dense<0.000000e+00> : vector<1xf32>
    %107 = vector.multi_reduction <add>, %106, %cst_36 [1, 2] : vector<1x64x1xf32> to vector<1xf32>
    %108 = vector.shape_cast %107 : vector<1xf32> to vector<1x1x1xf32>
    %109 = vector.extract %108[0, 0, 0] : f32 from vector<1x1x1xf32>
    %110 = vector.broadcast %109 : f32 to vector<1x1xf32>
    %111 = arith.mulf %110, %59 : vector<1x1xf32>
    %112 = arith.negf %43 : vector<64x1xf32>
    %113 = math.exp %112 : vector<64x1xf32>
    %cst_37 = arith.constant 1.000000e+00 : f32
    %114 = vector.broadcast %cst_37 : f32 to vector<64x1xf32>
    %115 = arith.addf %114, %113 : vector<64x1xf32>
    %116 = arith.divf %114, %115 : vector<64x1xf32>
    %117 = arith.subf %116, %3 : vector<64x1xf32>
    %118 = math.absf %117 : vector<64x1xf32>
    %119 = arith.mulf %118, %37 : vector<64x1xf32>
    %120 = vector.shape_cast %119 : vector<64x1xf32> to vector<1x64x1xf32>
    %cst_38 = arith.constant dense<0.000000e+00> : vector<1xf32>
    %121 = vector.multi_reduction <add>, %120, %cst_38 [1, 2] : vector<1x64x1xf32> to vector<1xf32>
    %122 = vector.shape_cast %121 : vector<1xf32> to vector<1x1x1xf32>
    %123 = vector.extract %122[0, 0, 0] : f32 from vector<1x1x1xf32>
    %124 = vector.broadcast %123 : f32 to vector<1x1xf32>
    %125 = arith.mulf %124, %63 : vector<1x1xf32>
    %126 = tpu.iota {dimensions = array<i32: 0>} : vector<48x64xi32>
    %127 = vector.broadcast %2 : vector<1x64xi32> to vector<48x64xi32>
    %128 = arith.cmpi eq, %126, %127 : vector<48x64xi32>
    %129 = arith.extui %128 : vector<48x64xi1> to vector<48x64xi32>
    %130 = arith.sitofp %129 : vector<48x64xi32> to vector<48x64xf32>
    %cst_39 = arith.constant dense<0xFF800000> : vector<48xf32>
    %131 = vector.multi_reduction <maximumf>, %130, %cst_39 [1] : vector<48x64xf32> to vector<48xf32>
    %132 = vector.shape_cast %131 : vector<48xf32> to vector<48x1xf32>
    %133 = vector.shape_cast %132 : vector<48x1xf32> to vector<1x48x1xf32>
    %cst_40 = arith.constant dense<0.000000e+00> : vector<1xf32>
    %134 = vector.multi_reduction <add>, %133, %cst_40 [1, 2] : vector<1x48x1xf32> to vector<1xf32>
    %135 = vector.shape_cast %134 : vector<1xf32> to vector<1x1x1xf32>
    %136 = vector.extract %135[0, 0, 0] : f32 from vector<1x1x1xf32>
    %137 = vector.broadcast %136 : f32 to vector<1x1xf32>
    %c0_41 = arith.constant 0 : index
    %c0_42 = arith.constant 0 : index
    %138 = vector.load %arg6[%c0_41, %c0_42] : memref<48x32xf32, #tpu.memory_space<vmem>>, vector<48x32xf32>
    %c0_43 = arith.constant 0 : index
    %c0_44 = arith.constant 0 : index
    %139 = vector.load %arg7[%c0_43, %c0_44] : memref<48x32xf32, #tpu.memory_space<vmem>>, vector<48x32xf32>
    %140 = arith.subf %138, %139 : vector<48x32xf32>
    %141 = arith.mulf %140, %140 : vector<48x32xf32>
    %142 = vector.broadcast %132 : vector<48x1xf32> to vector<48x32xf32>
    %143 = arith.mulf %141, %142 : vector<48x32xf32>
    %144 = vector.shape_cast %143 : vector<48x32xf32> to vector<1x48x32xf32>
    %cst_45 = arith.constant dense<0.000000e+00> : vector<1xf32>
    %145 = vector.multi_reduction <add>, %144, %cst_45 [1, 2] : vector<1x48x32xf32> to vector<1xf32>
    %146 = vector.shape_cast %145 : vector<1xf32> to vector<1x1x1xf32>
    %147 = vector.extract %146[0, 0, 0] : f32 from vector<1x1x1xf32>
    %148 = vector.broadcast %147 : f32 to vector<1x1xf32>
    %cst_46 = arith.constant 1.000000e+00 : f32
    %149 = vector.broadcast %cst_46 : f32 to vector<1x1xf32>
    %150 = arith.maximumf %137, %149 : vector<1x1xf32>
    %cst_47 = arith.constant 3.200000e+01 : f32
    %151 = vector.broadcast %cst_47 : f32 to vector<1x1xf32>
    %152 = arith.mulf %150, %151 : vector<1x1xf32>
    %153 = arith.divf %148, %152 : vector<1x1xf32>
    %154 = tpu.iota {dimensions = array<i32: 1>} : vector<1x128xi32>
    %c0_i32 = arith.constant 0 : i32
    %155 = vector.broadcast %c0_i32 : i32 to vector<1x128xi32>
    %156 = arith.cmpi eq, %154, %155 : vector<1x128xi32>
    %cst_48 = arith.constant 0.000000e+00 : f32
    %157 = vector.shape_cast %80 : vector<1x1xf32> to vector<1x1xf32>
    %158 = vector.broadcast %157 : vector<1x1xf32> to vector<1x128xf32>
    %159 = vector.broadcast %cst_48 : f32 to vector<1x128xf32>
    %160 = arith.select %156, %158, %159 : vector<1x128xi1>, vector<1x128xf32>
    %c1_i32_49 = arith.constant 1 : i32
    %161 = vector.broadcast %c1_i32_49 : i32 to vector<1x128xi32>
    %162 = arith.cmpi eq, %154, %161 : vector<1x128xi32>
    %cst_50 = arith.constant 0.000000e+00 : f32
    %163 = vector.shape_cast %97 : vector<1x1xf32> to vector<1x1xf32>
    %164 = vector.broadcast %163 : vector<1x1xf32> to vector<1x128xf32>
    %165 = vector.broadcast %cst_50 : f32 to vector<1x128xf32>
    %166 = arith.select %162, %164, %165 : vector<1x128xi1>, vector<1x128xf32>
    %167 = arith.addf %160, %166 : vector<1x128xf32>
    %c2_i32 = arith.constant 2 : i32
    %168 = vector.broadcast %c2_i32 : i32 to vector<1x128xi32>
    %169 = arith.cmpi eq, %154, %168 : vector<1x128xi32>
    %cst_51 = arith.constant 0.000000e+00 : f32
    %170 = vector.shape_cast %153 : vector<1x1xf32> to vector<1x1xf32>
    %171 = vector.broadcast %170 : vector<1x1xf32> to vector<1x128xf32>
    %172 = vector.broadcast %cst_51 : f32 to vector<1x128xf32>
    %173 = arith.select %169, %171, %172 : vector<1x128xi1>, vector<1x128xf32>
    %174 = arith.addf %167, %173 : vector<1x128xf32>
    %c3_i32 = arith.constant 3 : i32
    %175 = vector.broadcast %c3_i32 : i32 to vector<1x128xi32>
    %176 = arith.cmpi eq, %154, %175 : vector<1x128xi32>
    %cst_52 = arith.constant 0.000000e+00 : f32
    %177 = vector.shape_cast %111 : vector<1x1xf32> to vector<1x1xf32>
    %178 = vector.broadcast %177 : vector<1x1xf32> to vector<1x128xf32>
    %179 = vector.broadcast %cst_52 : f32 to vector<1x128xf32>
    %180 = arith.select %176, %178, %179 : vector<1x128xi1>, vector<1x128xf32>
    %181 = arith.addf %174, %180 : vector<1x128xf32>
    %c4_i32 = arith.constant 4 : i32
    %182 = vector.broadcast %c4_i32 : i32 to vector<1x128xi32>
    %183 = arith.cmpi eq, %154, %182 : vector<1x128xi32>
    %cst_53 = arith.constant 0.000000e+00 : f32
    %184 = vector.shape_cast %125 : vector<1x1xf32> to vector<1x1xf32>
    %185 = vector.broadcast %184 : vector<1x1xf32> to vector<1x128xf32>
    %186 = vector.broadcast %cst_53 : f32 to vector<1x128xf32>
    %187 = arith.select %183, %185, %186 : vector<1x128xi1>, vector<1x128xf32>
    %188 = arith.addf %181, %187 : vector<1x128xf32>
    %c0_54 = arith.constant 0 : index
    %c0_55 = arith.constant 0 : index
    %189 = vector.load %arg8[%c0_54, %c0_55] : memref<1x128xf32, #tpu.memory_space<vmem>>, vector<1x128xf32>
    tpu.vector_store %arg8[%c0_54, %c0_55], %188 {strides = array<i32>} : memref<1x128xf32, #tpu.memory_space<vmem>>, vector<1x128xf32>,
    return
  }
}

</mosaic_0001>

<llo_original>
// kernel: cause_forward.1
$region0: #{cause_forward.1}
  #allocation0 [shape = 'u32[]', space=smem, size = 0x4, offset = 0x4, fixed_abs, tag = 'smem constant byte address 0x4 - core index']
  #allocation1 [shape = 'u32[144,128]{1,0:T(1,128)}', space=vmem, size = 0x12000, scoped, tag = 'internal scratch']
  %s0 = inlined_call_operand.vmem [shape: s32[64,1], index: 0, kind: input, shape index: {}]
  %s1 = inlined_call_operand.vmem [shape: s32[64,1], index: 1, kind: input, shape index: {}]
  %s2 = inlined_call_operand.vmem [shape: s32[1,64], index: 2, kind: input, shape index: {}]
  %s3 = inlined_call_operand.vmem [shape: f32[64,1], index: 3, kind: input, shape index: {}]
  %s4 = inlined_call_operand.vmem [shape: f32[1,8], index: 4, kind: input, shape index: {}]
  %s5 = inlined_call_operand.vmem [shape: f32[64,32], index: 5, kind: input, shape index: {}]
  %s6 = inlined_call_operand.vmem [shape: f32[48,32], index: 6, kind: input, shape index: {}]
  %s7 = inlined_call_operand.vmem [shape: f32[48,32], index: 7, kind: input, shape index: {}]
  %s8 = inlined_call_operand.vmem [shape: f32[1,128], index: 8, kind: output, shape index: {}]
  %s9 = sld [smem:[#allocation0]]
  $region42: #{cause_forward.1} parent=0
    _
  %s11 = ssub.s32 1, %s9
  %s12 = scalar_select 0, %s11, %s9
  // Predicated region
  $region2: #{cause_forward.1} parent=0 // pred_check
    _
  $region3: #{cause_forward.1} parent=0 // pred_check_branch
    %14 = sbr.rel (0) target = $region5
  $region4: #{cause_forward.1} parent=0 // pred_region
    _
  $region5: #{cause_forward.1} parent=0 // pred_fallthru
    _
  // Predicated region
  $region6: #{cause_forward.1} parent=0 // pred_check
    _
  $region7: #{cause_forward.1} parent=0 // pred_check_branch
    %16 = sbr.rel (0) target = $region9
  $region8: #{cause_forward.1} parent=0 // pred_region
    _
  $region9: #{cause_forward.1} parent=0 // pred_fallthru
    _
  // Predicated region
  $region10: #{cause_forward.1} parent=0 // pred_check
    _
  $region11: #{cause_forward.1} parent=0 // pred_check_branch
    %18 = sbr.rel (0) target = $region13
  $region12: #{cause_forward.1} parent=0 // pred_region
    _
  $region13: #{cause_forward.1} parent=0 // pred_fallthru
    _
  // Predicated region
  $region14: #{cause_forward.1} parent=0 // pred_check
    _
  $region15: #{cause_forward.1} parent=0 // pred_check_branch
    %20 = sbr.rel (0) target = $region17
  $region16: #{cause_forward.1} parent=0 // pred_region
    _
  $region17: #{cause_forward.1} parent=0 // pred_fallthru
    _
  // Predicated region
  $region18: #{cause_forward.1} parent=0 // pred_check
    _
  $region19: #{cause_forward.1} parent=0 // pred_check_branch
    %22 = sbr.rel (0) target = $region21
  $region20: #{cause_forward.1} parent=0 // pred_region
    _
  $region21: #{cause_forward.1} parent=0 // pred_fallthru
    _
  // Predicated region
  $region22: #{cause_forward.1} parent=0 // pred_check
    _
  $region23: #{cause_forward.1} parent=0 // pred_check_branch
    %24 = sbr.rel (0) target = $region25
  $region24: #{cause_forward.1} parent=0 // pred_region
    _
  $region25: #{cause_forward.1} parent=0 // pred_fallthru
    _
  // Predicated region
  $region26: #{cause_forward.1} parent=0 // pred_check
    _
  $region27: #{cause_forward.1} parent=0 // pred_check_branch
    %26 = sbr.rel (0) target = $region29
  $region28: #{cause_forward.1} parent=0 // pred_region
    _
  $region29: #{cause_forward.1} parent=0 // pred_fallthru
    _
  // Predicated region
  $region30: #{cause_forward.1} parent=0 // pred_check
    _
  $region31: #{cause_forward.1} parent=0 // pred_check_branch
    %28 = sbr.rel (0) target = $region33
  $region32: #{cause_forward.1} parent=0 // pred_region
    _
  $region33: #{cause_forward.1} parent=0 // pred_fallthru
    _
  %v29 = vld [vmem:[%s0] sm:$0xff]
  %v30 = vld [vmem:[%s0 + $0x8] sm:$0xff]
  %v31 = vld [vmem:[%s0 + $0x10] sm:$0xff]
  %v32 = vld [vmem:[%s0 + $0x18] sm:$0xff]
  %v33 = vld [vmem:[%s0 + $0x20] sm:$0xff]
  %v34 = vld [vmem:[%s0 + $0x28] sm:$0xff]
  %v35 = vld [vmem:[%s0 + $0x30] sm:$0xff]
  %v36 = vld [vmem:[%s0 + $0x38] sm:$0xff]
  %v37 = vld [vmem:[%s1] sm:$0xff]
  %v38 = vld [vmem:[%s1 + $0x8] sm:$0xff]
  %v39 = vld [vmem:[%s1 + $0x10] sm:$0xff]
  %v40 = vld [vmem:[%s1 + $0x18] sm:$0xff]
  %v41 = vld [vmem:[%s1 + $0x20] sm:$0xff]
  %v42 = vld [vmem:[%s1 + $0x28] sm:$0xff]
  %v43 = vld [vmem:[%s1 + $0x30] sm:$0xff]
  %v44 = vld [vmem:[%s1 + $0x38] sm:$0xff]
  %v45 = vld [vmem:[%s2] sm:$0x1]
  %v46 = vld [vmem:[%s3] sm:$0xff]
  %v47 = vld [vmem:[%s3 + $0x8] sm:$0xff]
  %v48 = vld [vmem:[%s3 + $0x10] sm:$0xff]
  %v49 = vld [vmem:[%s3 + $0x18] sm:$0xff]
  %v50 = vld [vmem:[%s3 + $0x20] sm:$0xff]
  %v51 = vld [vmem:[%s3 + $0x28] sm:$0xff]
  %v52 = vld [vmem:[%s3 + $0x30] sm:$0xff]
  %v53 = vld [vmem:[%s3 + $0x38] sm:$0xff]
  %v54 = vlaneseq
  %v55 = vand.u32 %v54, 127
  %56 = vset.pattern.permute.xlu0 0
  %57 = vperm.xlu0 %56, %v29
  %v58 = vpop.permute.xlu0 %57
  %59 = vset.pattern.permute.xlu0 0
  %60 = vperm.xlu0 %59, %v30
  %v61 = vpop.permute.xlu0 %60
  %62 = vset.pattern.permute.xlu0 0
  %63 = vperm.xlu0 %62, %v31
  %v64 = vpop.permute.xlu0 %63
  %65 = vset.pattern.permute.xlu0 0
  %66 = vperm.xlu0 %65, %v32
  %v67 = vpop.permute.xlu0 %66
  %68 = vset.pattern.permute.xlu0 0
  %69 = vperm.xlu0 %68, %v33
  %v70 = vpop.permute.xlu0 %69
  %71 = vset.pattern.permute.xlu0 0
  %72 = vperm.xlu0 %71, %v34
  %v73 = vpop.permute.xlu0 %72
  %74 = vset.pattern.permute.xlu0 0
  %75 = vperm.xlu0 %74, %v35
  %v76 = vpop.permute.xlu0 %75
  %77 = vset.pattern.permute.xlu0 0
  %78 = vperm.xlu0 %77, %v36
  %v79 = vpop.permute.xlu0 %78
  %vm80 = vcmp.eq.s32.totalorder %v55, %v58
  %vm81 = vcmp.eq.s32.totalorder %v55, %v61
  %vm82 = vcmp.eq.s32.totalorder %v55, %v64
  %vm83 = vcmp.eq.s32.totalorder %v55, %v67
  %vm84 = vcmp.eq.s32.totalorder %v55, %v70
  %vm85 = vcmp.eq.s32.totalorder %v55, %v73
  %vm86 = vcmp.eq.s32.totalorder %v55, %v76
  %vm87 = vcmp.eq.s32.totalorder %v55, %v79
  %v88 = vsel %vm80, 1, 0
  %v89 = vsel %vm81, 1, 0
  %v90 = vsel %vm82, 1, 0
  %v91 = vsel %vm83, 1, 0
  %v92 = vsel %vm84, 1, 0
  %v93 = vsel %vm85, 1, 0
  %v94 = vsel %vm86, 1, 0
  %v95 = vsel %vm87, 1, 0
  %v96 = vcvt.s32.f32 %v88
  %v97 = vcvt.s32.f32 %v89
  %v98 = vcvt.s32.f32 %v90
  %v99 = vcvt.s32.f32 %v91
  %v100 = vcvt.s32.f32 %v92
  %v101 = vcvt.s32.f32 %v93
  %v102 = vcvt.s32.f32 %v94
  %v103 = vcvt.s32.f32 %v95
  %104 = vset.pattern.permute.xlu0 0
  %105 = vperm.xlu0 %104, %v37
  %v106 = vpop.permute.xlu0 %105
  %107 = vset.pattern.permute.xlu0 0
  %108 = vperm.xlu0 %107, %v38
  %v109 = vpop.permute.xlu0 %108
  %110 = vset.pattern.permute.xlu0 0
  %111 = vperm.xlu0 %110, %v39
  %v112 = vpop.permute.xlu0 %111
  %113 = vset.pattern.permute.xlu0 0
  %114 = vperm.xlu0 %113, %v40
  %v115 = vpop.permute.xlu0 %114
  %116 = vset.pattern.permute.xlu0 0
  %117 = vperm.xlu0 %116, %v41
  %v118 = vpop.permute.xlu0 %117
  %119 = vset.pattern.permute.xlu0 0
  %120 = vperm.xlu0 %119, %v42
  %v121 = vpop.permute.xlu0 %120
  %122 = vset.pattern.permute.xlu0 0
  %123 = vperm.xlu0 %122, %v43
  %v124 = vpop.permute.xlu0 %123
  %125 = vset.pattern.permute.xlu0 0
  %126 = vperm.xlu0 %125, %v44
  %v127 = vpop.permute.xlu0 %126
  %vm128 = vcmp.eq.s32.totalorder %v55, %v106
  %vm129 = vcmp.eq.s32.totalorder %v55, %v109
  %vm130 = vcmp.eq.s32.totalorder %v55, %v112
  %vm131 = vcmp.eq.s32.totalorder %v55, %v115
  %vm132 = vcmp.eq.s32.totalorder %v55, %v118
  %vm133 = vcmp.eq.s32.totalorder %v55, %v121
  %vm134 = vcmp.eq.s32.totalorder %v55, %v124
  %vm135 = vcmp.eq.s32.totalorder %v55, %v127
  %v136 = vsel %vm128, 1, 0
  %v137 = vsel %vm129, 1, 0
  %v138 = vsel %vm130, 1, 0
  %v139 = vsel %vm131, 1, 0
  %v140 = vsel %vm132, 1, 0
  %v141 = vsel %vm133, 1, 0
  %v142 = vsel %vm134, 1, 0
  %v143 = vsel %vm135, 1, 0
  %v144 = vcvt.s32.f32 %v136
  %v145 = vcvt.s32.f32 %v137
  %v146 = vcvt.s32.f32 %v138
  %v147 = vcvt.s32.f32 %v139
  %v148 = vcvt.s32.f32 %v140
  %v149 = vcvt.s32.f32 %v141
  %v150 = vcvt.s32.f32 %v142
  %v151 = vcvt.s32.f32 %v143
  %v152 = vld [vmem:[%s5] sm:$0xff]
  %v153 = vld [vmem:[%s5 + $0x8] sm:$0xff]
  %v154 = vld [vmem:[%s5 + $0x10] sm:$0xff]
  %v155 = vld [vmem:[%s5 + $0x18] sm:$0xff]
  %v156 = vld [vmem:[%s5 + $0x20] sm:$0xff]
  %v157 = vld [vmem:[%s5 + $0x28] sm:$0xff]
  %v158 = vld [vmem:[%s5 + $0x30] sm:$0xff]
  %v159 = vld [vmem:[%s5 + $0x38] sm:$0xff]
  %vm160 = vcmask 523264
  %v162 = vsel %vm160, %v96, 0
  %v165 = vsel %vm160, %v97, 0
  %v168 = vsel %vm160, %v98, 0
  %v171 = vsel %vm160, %v99, 0
  %v174 = vsel %vm160, %v100, 0
  %v177 = vsel %vm160, %v101, 0
  %v180 = vsel %vm160, %v102, 0
  %v183 = vsel %vm160, %v103, 0
  %185 = vmatprep.subr.mxu0 0.0
  %186 = vmatpush1.msra.mxu0 %v152
  %187 = vmatprep.subr.mxu0 0.0
  %188 = vmatpush1.msra.mxu0 %v153
  %189 = vmatprep.subr.mxu0 0.0
  %190 = vmatpush1.msra.mxu0 %v154
  %191 = vmatprep.subr.mxu0 0.0
  %192 = vmatpush1.msra.mxu0 %v155
  %193 = vmatprep.subr.mxu0 0.0
  %194 = vmatpush1.msra.mxu0 %v156
  %195 = vmatprep.subr.mxu0 0.0
  %196 = vmatpush1.msra.mxu0 %v157
  %197 = vmatprep.subr.mxu0 0.0
  %198 = vmatpush1.msra.mxu0 %v158
  %199 = vmatprep.subr.mxu0 0.0
  %200 = vmatpush1.msra.mxu0 %v159
  %201 = vmatprep.subr.mxu0 0.0
  %202 = vmatpush1.msra.mxu0 0.0
  %203 = vmatprep.subr.mxu0 0.0
  %204 = vmatpush1.msra.mxu0 0.0
  %205 = vmatprep.subr.mxu0 0.0
  %206 = vmatpush1.msra.mxu0 0.0
  %207 = vmatprep.subr.mxu0 0.0
  %208 = vmatpush1.msra.mxu0 0.0
  %209 = vmatprep.subr.mxu0 0.0
  %210 = vmatpush1.msra.mxu0 0.0
  %211 = vmatprep.subr.mxu0 0.0
  %212 = vmatpush1.msra.mxu0 0.0
  %213 = vmatprep.subr.mxu0 0.0
  %214 = vmatpush1.msra.mxu0 0.0
  %215 = vmatprep.subr.mxu0 0.0
  %216 = vmatpush1.msra.mxu0 0.0
  %217 = vmatprep.subr.mxu0 0.0
  %218 = vmatpush1.msra.mxu0 0.0
  %219 = vmatprep.subr.mxu0 0.0
  %220 = vmatpush1.msra.mxu0 0.0
  %221 = vmatprep.subr.mxu0 0.0
  %222 = vmatpush1.msra.mxu0 0.0
  %223 = vmatprep.subr.mxu0 0.0
  %224 = vmatpush1.msra.mxu0 0.0
  %225 = vmatprep.subr.mxu0 0.0
  %226 = vmatpush1.msra.mxu0 0.0
  %227 = vmatprep.subr.mxu0 0.0
  %228 = vmatpush1.msra.mxu0 0.0
  %229 = vmatprep.subr.mxu0 0.0
  %230 = vmatpush1.msra.mxu0 0.0
  %231 = vmatprep.subr.mxu0 0.0
  %232 = vmatpush1.msra.mxu0 0.0
  %233 = vmatprep.subr.mxu0 0.0
  %234 = vmatpush1.msra.mxu0 0.0
  %235 = vmatprep.subr.mxu0 0.0
  %236 = vmatpush1.msra.mxu0 0.0
  %237 = vmatprep.subr.mxu0 0.0
  %238 = vmatpush1.msra.mxu0 0.0
  %239 = vmatprep.subr.mxu0 0.0
  %240 = vmatpush1.msra.mxu0 0.0
  %241 = vmatprep.subr.mxu0 0.0
  %242 = vmatpush1.msra.mxu0 0.0
  %243 = vmatprep.subr.mxu0 0.0
  %244 = vmatpush1.msra.mxu0 0.0
  %245 = vmatprep.subr.mxu0 0.0
  %246 = vmatpush1.msra.mxu0 0.0
  %247 = vmatprep.subr.mxu0 0.0
  %248 = vmatpush1.msra.mxu0 0.0
  %249 = vmatprep.mubr.f32.mxu0 0.0
  %250 = vmatmul.mubr.f32.gmra.mrb[0].mxu0 %v162
  %v251 = vpop.f32.mrb[0].mxu0
  %v252 = vadd.f32 0.0, %v251
  %v253 = vpop.f32.mrb[0].mxu0
  %254 = vmatprep.mubr.f32.mxu0 0.0
  %255 = vmatmul.mubr.f32.gmra.mrb[0].mxu0 %v165
  %v256 = vpop.f32.mrb[0].mxu0
  %v257 = vadd.f32 0.0, %v256
  %v258 = vpop.f32.mrb[0].mxu0
  %259 = vmatprep.mubr.f32.mxu0 0.0
  %260 = vmatmul.mubr.f32.gmra.mrb[0].mxu0 %v168
  %v261 = vpop.f32.mrb[0].mxu0
  %v262 = vadd.f32 0.0, %v261
  %v263 = vpop.f32.mrb[0].mxu0
  %264 = vmatprep.mubr.f32.mxu0 0.0
  %265 = vmatmul.mubr.f32.gmra.mrb[0].mxu0 %v171
  %v266 = vpop.f32.mrb[0].mxu0
  %v267 = vadd.f32 0.0, %v266
  %v268 = vpop.f32.mrb[0].mxu0
  %269 = vmatprep.mubr.f32.mxu0 0.0
  %270 = vmatmul.mubr.f32.gmra.mrb[0].mxu0 %v174
  %v271 = vpop.f32.mrb[0].mxu0
  %v272 = vadd.f32 0.0, %v271
  %v273 = vpop.f32.mrb[0].mxu0
  %274 = vmatprep.mubr.f32.mxu0 0.0
  %275 = vmatmul.mubr.f32.gmra.mrb[0].mxu0 %v177
  %v276 = vpop.f32.mrb[0].mxu0
  %v277 = vadd.f32 0.0, %v276
  %v278 = vpop.f32.mrb[0].mxu0
  %279 = vmatprep.mubr.f32.mxu0 0.0
  %280 = vmatmul.mubr.f32.gmra.mrb[0].mxu0 %v180
  %v281 = vpop.f32.mrb[0].mxu0
  %v282 = vadd.f32 0.0, %v281
  %v283 = vpop.f32.mrb[0].mxu0
  %284 = vmatprep.mubr.f32.mxu0 0.0
  %285 = vmatmul.mubr.f32.gmra.mrb[0].mxu0 %v183
  %v286 = vpop.f32.mrb[0].mxu0
  %v287 = vadd.f32 0.0, %v286
  %v288 = vpop.f32.mrb[0].mxu0
  %289 = vdwg.mxu0
  %v290 = vld [vmem:[%s6] sm:$0xff]
  %v291 = vld [vmem:[%s6 + $0x8] sm:$0xff]
  %v292 = vld [vmem:[%s6 + $0x10] sm:$0xff]
  %v293 = vld [vmem:[%s6 + $0x18] sm:$0xff]
  %v294 = vld [vmem:[%s6 + $0x20] sm:$0xff]
  %v295 = vld [vmem:[%s6 + $0x28] sm:$0xff]
  %vm296 = vcmask 392192
  %v298 = vsel %vm296, %v144, 0
  %v301 = vsel %vm296, %v145, 0
  %v304 = vsel %vm296, %v146, 0
  %v307 = vsel %vm296, %v147, 0
  %v310 = vsel %vm296, %v148, 0
  %v313 = vsel %vm296, %v149, 0
  %v316 = vsel %vm296, %v150, 0
  %v319 = vsel %vm296, %v151, 0
  %321 = vmatprep.subr.mxu0 0.0
  %322 = vmatpush1.msra.mxu0 %v290
  %323 = vmatprep.subr.mxu0 0.0
  %324 = vmatpush1.msra.mxu0 %v291
  %325 = vmatprep.subr.mxu0 0.0
  %326 = vmatpush1.msra.mxu0 %v292
  %327 = vmatprep.subr.mxu0 0.0
  %328 = vmatpush1.msra.mxu0 %v293
  %329 = vmatprep.subr.mxu0 0.0
  %330 = vmatpush1.msra.mxu0 %v294
  %331 = vmatprep.subr.mxu0 0.0
  %332 = vmatpush1.msra.mxu0 %v295
  %333 = vmatprep.subr.mxu0 0.0
  %334 = vmatpush1.msra.mxu0 0.0
  %335 = vmatprep.subr.mxu0 0.0
  %336 = vmatpush1.msra.mxu0 0.0
  %337 = vmatprep.subr.mxu0 0.0
  %338 = vmatpush1.msra.mxu0 0.0
  %339 = vmatprep.subr.mxu0 0.0
  %340 = vmatpush1.msra.mxu0 0.0
  %341 = vmatprep.subr.mxu0 0.0
  %342 = vmatpush1.msra.mxu0 0.0
  %343 = vmatprep.subr.mxu0 0.0
  %344 = vmatpush1.msra.mxu0 0.0
  %345 = vmatprep.subr.mxu0 0.0
  %346 = vmatpush1.msra.mxu0 0.0
  %347 = vmatprep.subr.mxu0 0.0
  %348 = vmatpush1.msra.mxu0 0.0
  %349 = vmatprep.subr.mxu0 0.0
  %350 = vmatpush1.msra.mxu0 0.0
  %351 = vmatprep.subr.mxu0 0.0
  %352 = vmatpush1.msra.mxu0 0.0
  %353 = vmatprep.subr.mxu0 0.0
  %354 = vmatpush1.msra.mxu0 0.0
  %355 = vmatprep.subr.mxu0 0.0
  %356 = vmatpush1.msra.mxu0 0.0
  %357 = vmatprep.subr.mxu0 0.0
  %358 = vmatpush1.msra.mxu0 0.0
  %359 = vmatprep.subr.mxu0 0.0
  %360 = vmatpush1.msra.mxu0 0.0
  %361 = vmatprep.subr.mxu0 0.0
  %362 = vmatpush1.msra.mxu0 0.0
  %363 = vmatprep.subr.mxu0 0.0
  %364 = vmatpush1.msra.mxu0 0.0
  %365 = vmatprep.subr.mxu0 0.0
  %366 = vmatpush1.msra.mxu0 0.0
  %367 = vmatprep.subr.mxu0 0.0
  %368 = vmatpush1.msra.mxu0 0.0
  %369 = vmatprep.subr.mxu0 0.0
  %370 = vmatpush1.msra.mxu0 0.0
  %371 = vmatprep.subr.mxu0 0.0
  %372 = vmatpush1.msra.mxu0 0.0
  %373 = vmatprep.subr.mxu0 0.0
  %374 = vmatpush1.msra.mxu0 0.0
  %375 = vmatprep.subr.mxu0 0.0
  %376 = vmatpush1.msra.mxu0 0.0
  %377 = vmatprep.subr.mxu0 0.0
  %378 = vmatpush1.msra.mxu0 0.0
  %379 = vmatprep.subr.mxu0 0.0
  %380 = vmatpush1.msra.mxu0 0.0
  %381 = vmatprep.subr.mxu0 0.0
  %382 = vmatpush1.msra.mxu0 0.0
  %383 = vmatprep.subr.mxu0 0.0
  %384 = vmatpush1.msra.mxu0 0.0
  %385 = vmatprep.mubr.f32.mxu0 0.0
  %386 = vmatmul.mubr.f32.gmra.mrb[0].mxu0 %v298
  %v387 = vpop.f32.mrb[0].mxu0
  %v388 = vadd.f32 0.0, %v387
  %v389 = vpop.f32.mrb[0].mxu0
  %390 = vmatprep.mubr.f32.mxu0 0.0
  %391 = vmatmul.mubr.f32.gmra.mrb[0].mxu0 %v301
  %v392 = vpop.f32.mrb[0].mxu0
  %v393 = vadd.f32 0.0, %v392
  %v394 = vpop.f32.mrb[0].mxu0
  %395 = vmatprep.mubr.f32.mxu0 0.0
  %396 = vmatmul.mubr.f32.gmra.mrb[0].mxu0 %v304
  %v397 = vpop.f32.mrb[0].mxu0
  %v398 = vadd.f32 0.0, %v397
  %v399 = vpop.f32.mrb[0].mxu0
  %400 = vmatprep.mubr.f32.mxu0 0.0
  %401 = vmatmul.mubr.f32.gmra.mrb[0].mxu0 %v307
  %v402 = vpop.f32.mrb[0].mxu0
  %v403 = vadd.f32 0.0, %v402
  %v404 = vpop.f32.mrb[0].mxu0
  %405 = vmatprep.mubr.f32.mxu0 0.0
  %406 = vmatmul.mubr.f32.gmra.mrb[0].mxu0 %v310
  %v407 = vpop.f32.mrb[0].mxu0
  %v408 = vadd.f32 0.0, %v407
  %v409 = vpop.f32.mrb[0].mxu0
  %410 = vmatprep.mubr.f32.mxu0 0.0
  %411 = vmatmul.mubr.f32.gmra.mrb[0].mxu0 %v313
  %v412 = vpop.f32.mrb[0].mxu0
  %v413 = vadd.f32 0.0, %v412
  %v414 = vpop.f32.mrb[0].mxu0
  %415 = vmatprep.mubr.f32.mxu0 0.0
  %416 = vmatmul.mubr.f32.gmra.mrb[0].mxu0 %v316
  %v417 = vpop.f32.mrb[0].mxu0
  %v418 = vadd.f32 0.0, %v417
  %v419 = vpop.f32.mrb[0].mxu0
  %420 = vmatprep.mubr.f32.mxu0 0.0
  %421 = vmatmul.mubr.f32.gmra.mrb[0].mxu0 %v319
  %v422 = vpop.f32.mrb[0].mxu0
  %v423 = vadd.f32 0.0, %v422
  %v424 = vpop.f32.mrb[0].mxu0
  %425 = vdwg.mxu0
  %v426 = vld [vmem:[%s7] sm:$0xff]
  %v427 = vld [vmem:[%s7 + $0x8] sm:$0xff]
  %v428 = vld [vmem:[%s7 + $0x10] sm:$0xff]
  %v429 = vld [vmem:[%s7 + $0x18] sm:$0xff]
  %v430 = vld [vmem:[%s7 + $0x20] sm:$0xff]
  %v431 = vld [vmem:[%s7 + $0x28] sm:$0xff]
  %432 = vmatprep.subr.mxu0 0.0
  %433 = vmatpush1.msra.mxu0 %v426
  %434 = vmatprep.subr.mxu0 0.0
  %435 = vmatpush1.msra.mxu0 %v427
  %436 = vmatprep.subr.mxu0 0.0
  %437 = vmatpush1.msra.mxu0 %v428
  %438 = vmatprep.subr.mxu0 0.0
  %439 = vmatpush1.msra.mxu0 %v429
  %440 = vmatprep.subr.mxu0 0.0
  %441 = vmatpush1.msra.mxu0 %v430
  %442 = vmatprep.subr.mxu0 0.0
  %443 = vmatpush1.msra.mxu0 %v431
  %444 = vmatprep.subr.mxu0 0.0
  %445 = vmatpush1.msra.mxu0 0.0
  %446 = vmatprep.subr.mxu0 0.0
  %447 = vmatpush1.msra.mxu0 0.0
  %448 = vmatprep.subr.mxu0 0.0
  %449 = vmatpush1.msra.mxu0 0.0
  %450 = vmatprep.subr.mxu0 0.0
  %451 = vmatpush1.msra.mxu0 0.0
  %452 = vmatprep.subr.mxu0 0.0
  %453 = vmatpush1.msra.mxu0 0.0
  %454 = vmatprep.subr.mxu0 0.0
  %455 = vmatpush1.msra.mxu0 0.0
  %456 = vmatprep.subr.mxu0 0.0
  %457 = vmatpush1.msra.mxu0 0.0
  %458 = vmatprep.subr.mxu0 0.0
  %459 = vmatpush1.msra.mxu0 0.0
  %460 = vmatprep.subr.mxu0 0.0
  %461 = vmatpush1.msra.mxu0 0.0
  %462 = vmatprep.subr.mxu0 0.0
  %463 = vmatpush1.msra.mxu0 0.0
  %464 = vmatprep.subr.mxu0 0.0
  %465 = vmatpush1.msra.mxu0 0.0
  %466 = vmatprep.subr.mxu0 0.0
  %467 = vmatpush1.msra.mxu0 0.0
  %468 = vmatprep.subr.mxu0 0.0
  %469 = vmatpush1.msra.mxu0 0.0
  %470 = vmatprep.subr.mxu0 0.0
  %471 = vmatpush1.msra.mxu0 0.0
  %472 = vmatprep.subr.mxu0 0.0
  %473 = vmatpush1.msra.mxu0 0.0
  %474 = vmatprep.subr.mxu0 0.0
  %475 = vmatpush1.msra.mxu0 0.0
  %476 = vmatprep.subr.mxu0 0.0
  %477 = vmatpush1.msra.mxu0 0.0
  %478 = vmatprep.subr.mxu0 0.0
  %479 = vmatpush1.msra.mxu0 0.0
  %480 = vmatprep.subr.mxu0 0.0
  %481 = vmatpush1.msra.mxu0 0.0
  %482 = vmatprep.subr.mxu0 0.0
  %483 = vmatpush1.msra.mxu0 0.0
  %484 = vmatprep.subr.mxu0 0.0
  %485 = vmatpush1.msra.mxu0 0.0
  %486 = vmatprep.subr.mxu0 0.0
  %487 = vmatpush1.msra.mxu0 0.0
  %488 = vmatprep.subr.mxu0 0.0
  %489 = vmatpush1.msra.mxu0 0.0
  %490 = vmatprep.subr.mxu0 0.0
  %491 = vmatpush1.msra.mxu0 0.0
  %492 = vmatprep.subr.mxu0 0.0
  %493 = vmatpush1.msra.mxu0 0.0
  %494 = vmatprep.subr.mxu0 0.0
  %495 = vmatpush1.msra.mxu0 0.0
  %496 = vmatprep.mubr.f32.mxu0 0.0
  %497 = vmatmul.mubr.f32.gmra.mrb[0].mxu0 %v298
  %v498 = vpop.f32.mrb[0].mxu0
  %v499 = vadd.f32 0.0, %v498
  %v500 = vpop.f32.mrb[0].mxu0
  %501 = vmatprep.mubr.f32.mxu0 0.0
  %502 = vmatmul.mubr.f32.gmra.mrb[0].mxu0 %v301
  %v503 = vpop.f32.mrb[0].mxu0
  %v504 = vadd.f32 0.0, %v503
  %v505 = vpop.f32.mrb[0].mxu0
  %506 = vmatprep.mubr.f32.mxu0 0.0
  %507 = vmatmul.mubr.f32.gmra.mrb[0].mxu0 %v304
  %v508 = vpop.f32.mrb[0].mxu0
  %v509 = vadd.f32 0.0, %v508
  %v510 = vpop.f32.mrb[0].mxu0
  %511 = vmatprep.mubr.f32.mxu0 0.0
  %512 = vmatmul.mubr.f32.gmra.mrb[0].mxu0 %v307
  %v513 = vpop.f32.mrb[0].mxu0
  %v514 = vadd.f32 0.0, %v513
  %v515 = vpop.f32.mrb[0].mxu0
  %516 = vmatprep.mubr.f32.mxu0 0.0
  %517 = vmatmul.mubr.f32.gmra.mrb[0].mxu0 %v310
  %v518 = vpop.f32.mrb[0].mxu0
  %v519 = vadd.f32 0.0, %v518
  %v520 = vpop.f32.mrb[0].mxu0
  %521 = vmatprep.mubr.f32.mxu0 0.0
  %522 = vmatmul.mubr.f32.gmra.mrb[0].mxu0 %v313
  %v523 = vpop.f32.mrb[0].mxu0
  %v524 = vadd.f32 0.0, %v523
  %v525 = vpop.f32.mrb[0].mxu0
  %526 = vmatprep.mubr.f32.mxu0 0.0
  %527 = vmatmul.mubr.f32.gmra.mrb[0].mxu0 %v316
  %v528 = vpop.f32.mrb[0].mxu0
  %v529 = vadd.f32 0.0, %v528
  %v530 = vpop.f32.mrb[0].mxu0
  %531 = vmatprep.mubr.f32.mxu0 0.0
  %532 = vmatmul.mubr.f32.gmra.mrb[0].mxu0 %v319
  %v533 = vpop.f32.mrb[0].mxu0
  %v534 = vadd.f32 0.0, %v533
  %v535 = vpop.f32.mrb[0].mxu0
  %536 = vdwg.mxu0
  %v537 = vlaneseq
  %v538 = vshrl.u32 %v537, 7
  %v539 = vadd.s32 %v538, 8
  %v540 = vadd.s32 %v538, 16
  %v541 = vadd.s32 %v538, 24
  %v542 = vadd.s32 %v538, 32
  %v543 = vadd.s32 %v538, 40
  %v544 = vadd.s32 %v538, 48
  %v545 = vadd.s32 %v538, 56
  %v546 = vmul.u32 %v55, 8
  %vm547 = vcmp.ge.s32.totalorder %v538, %v546
  %vm548 = vcmp.ge.s32.totalorder %v539, %v546
  %vm549 = vcmp.ge.s32.totalorder %v540, %v546
  %vm550 = vcmp.ge.s32.totalorder %v541, %v546
  %vm551 = vcmp.ge.s32.totalorder %v542, %v546
  %vm552 = vcmp.ge.s32.totalorder %v543, %v546
  %vm553 = vcmp.ge.s32.totalorder %v544, %v546
  %vm554 = vcmp.ge.s32.totalorder %v545, %v546
  %v555 = vadd.s32 %v55, 1
  %v556 = vmul.u32 %v555, 8
  %vm557 = vcmp.lt.s32.totalorder %v538, %v556
  %vm558 = vcmp.lt.s32.totalorder %v539, %v556
  %vm559 = vcmp.lt.s32.totalorder %v540, %v556
  %vm560 = vcmp.lt.s32.totalorder %v541, %v556
  %vm561 = vcmp.lt.s32.totalorder %v542, %v556
  %vm562 = vcmp.lt.s32.totalorder %v543, %v556
  %vm563 = vcmp.lt.s32.totalorder %v544, %v556
  %vm564 = vcmp.lt.s32.totalorder %v545, %v556
  %vm565 = vmand %vm547, %vm557
  %vm566 = vmand %vm548, %vm558
  %vm567 = vmand %vm549, %vm559
  %vm568 = vmand %vm550, %vm560
  %vm569 = vmand %vm551, %vm561
  %vm570 = vmand %vm552, %vm562
  %vm571 = vmand %vm553, %vm563
  %vm572 = vmand %vm554, %vm564
  %v573 = vld [vmem:[%s4] sm:$0x1]
  %v575 = vlaneseq
  %v576 = vshrl.u32 %v575, 7
  %v577 = vsub.s32 0, %v576
  %v578 = vrot.slane %v573, %v577
  %v580 = vsel %vm565, %v578, 0.0
  %v581 = vsel %vm566, %v578, 0.0
  %v582 = vsel %vm567, %v578, 0.0
  %v583 = vsel %vm568, %v578, 0.0
  %v584 = vsel %vm569, %v578, 0.0
  %v585 = vsel %vm570, %v578, 0.0
  %v586 = vsel %vm571, %v578, 0.0
  %v587 = vsel %vm572, %v578, 0.0
  %vm588 = vcmask 64512
  %v589 = vsel %vm588, %v580, 0.0
  %590 = vadd.xlane.f32.xlu0 %v589
  %v591 = vpop.xlane.xlu0 %590
  %v592 = vsel %vm588, %v581, 0.0
  %593 = vadd.xlane.f32.xlu0 %v592
  %v594 = vpop.xlane.xlu0 %593
  %v595 = vsel %vm588, %v582, 0.0
  %596 = vadd.xlane.f32.xlu0 %v595
  %v597 = vpop.xlane.xlu0 %596
  %v598 = vsel %vm588, %v583, 0.0
  %599 = vadd.xlane.f32.xlu0 %v598
  %v600 = vpop.xlane.xlu0 %599
  %v601 = vsel %vm588, %v584, 0.0
  %602 = vadd.xlane.f32.xlu0 %v601
  %v603 = vpop.xlane.xlu0 %602
  %v604 = vsel %vm588, %v585, 0.0
  %605 = vadd.xlane.f32.xlu0 %v604
  %v606 = vpop.xlane.xlu0 %605
  %v607 = vsel %vm588, %v586, 0.0
  %608 = vadd.xlane.f32.xlu0 %v607
  %v609 = vpop.xlane.xlu0 %608
  %v610 = vsel %vm588, %v587, 0.0
  %611 = vadd.xlane.f32.xlu0 %v610
  %v612 = vpop.xlane.xlu0 %611
  %v613 = vmul.f32 %v252, %v388
  %v614 = vmul.f32 %v257, %v393
  %v615 = vmul.f32 %v262, %v398
  %v616 = vmul.f32 %v267, %v403
  %v617 = vmul.f32 %v272, %v408
  %v618 = vmul.f32 %v277, %v413
  %v619 = vmul.f32 %v282, %v418
  %v620 = vmul.f32 %v287, %v423
  %vm621 = vcmask 261120
  %v622 = vsel %vm621, %v613, 0.0
  %623 = vadd.xlane.f32.xlu0 %v622
  %v624 = vpop.xlane.xlu0 %623
  %v625 = vsel %vm621, %v614, 0.0
  %626 = vadd.xlane.f32.xlu0 %v625
  %v627 = vpop.xlane.xlu0 %626
  %v628 = vsel %vm621, %v615, 0.0
  %629 = vadd.xlane.f32.xlu0 %v628
  %v630 = vpop.xlane.xlu0 %629
  %v631 = vsel %vm621, %v616, 0.0
  %632 = vadd.xlane.f32.xlu0 %v631
  %v633 = vpop.xlane.xlu0 %632
  %v634 = vsel %vm621, %v617, 0.0
  %635 = vadd.xlane.f32.xlu0 %v634
  %v636 = vpop.xlane.xlu0 %635
  %v637 = vsel %vm621, %v618, 0.0
  %638 = vadd.xlane.f32.xlu0 %v637
  %v639 = vpop.xlane.xlu0 %638
  %v640 = vsel %vm621, %v619, 0.0
  %641 = vadd.xlane.f32.xlu0 %v640
  %v642 = vpop.xlane.xlu0 %641
  %v643 = vsel %vm621, %v620, 0.0
  %644 = vadd.xlane.f32.xlu0 %v643
  %v645 = vpop.xlane.xlu0 %644
  %v646 = vmul.f32 %v252, %v499
  %v647 = vmul.f32 %v257, %v504
  %v648 = vmul.f32 %v262, %v509
  %v649 = vmul.f32 %v267, %v514
  %v650 = vmul.f32 %v272, %v519
  %v651 = vmul.f32 %v277, %v524
  %v652 = vmul.f32 %v282, %v529
  %v653 = vmul.f32 %v287, %v534
  %v654 = vsel %vm621, %v646, 0.0
  %655 = vadd.xlane.f32.xlu0 %v654
  %v656 = vpop.xlane.xlu0 %655
  %v657 = vsel %vm621, %v647, 0.0
  %658 = vadd.xlane.f32.xlu0 %v657
  %v659 = vpop.xlane.xlu0 %658
  %v660 = vsel %vm621, %v648, 0.0
  %661 = vadd.xlane.f32.xlu0 %v660
  %v662 = vpop.xlane.xlu0 %661
  %v663 = vsel %vm621, %v649, 0.0
  %664 = vadd.xlane.f32.xlu0 %v663
  %v665 = vpop.xlane.xlu0 %664
  %v666 = vsel %vm621, %v650, 0.0
  %667 = vadd.xlane.f32.xlu0 %v666
  %v668 = vpop.xlane.xlu0 %667
  %v669 = vsel %vm621, %v651, 0.0
  %670 = vadd.xlane.f32.xlu0 %v669
  %v671 = vpop.xlane.xlu0 %670
  %v672 = vsel %vm621, %v652, 0.0
  %673 = vadd.xlane.f32.xlu0 %v672
  %v674 = vpop.xlane.xlu0 %673
  %v675 = vsel %vm621, %v653, 0.0
  %676 = vadd.xlane.f32.xlu0 %v675
  %v677 = vpop.xlane.xlu0 %676
  %v678 = vsub.f32 1.0, %v591
  %v679 = vsub.f32 1.0, %v594
  %v680 = vsub.f32 1.0, %v597
  %v681 = vsub.f32 1.0, %v600
  %v682 = vsub.f32 1.0, %v603
  %v683 = vsub.f32 1.0, %v606
  %v684 = vsub.f32 1.0, %v609
  %v685 = vsub.f32 1.0, %v612
  %vm686 = vcmask 7168
  %v687 = vsel %vm686, %v678, 0.0
  %v688 = vsel %vm686, %v679, 0.0
  %v689 = vadd.f32 %v687, %v688
  %v690 = vsel %vm686, %v680, 0.0
  %v691 = vadd.f32 %v689, %v690
  %v692 = vsel %vm686, %v681, 0.0
  %v693 = vadd.f32 %v691, %v692
  %v694 = vsel %vm686, %v682, 0.0
  %v695 = vadd.f32 %v693, %v694
  %v696 = vsel %vm686, %v683, 0.0
  %v697 = vadd.f32 %v695, %v696
  %v698 = vsel %vm686, %v684, 0.0
  %v699 = vadd.f32 %v697, %v698
  %v700 = vsel %vm686, %v685, 0.0
  %v701 = vadd.f32 %v699, %v700
  %702 = vadd.xlane.f32.xlu0 %v701
  %v703 = vpop.xlane.xlu0 %702
  %v704 = vrot.slane %v703, 4
  %v705 = vadd.f32 %v703, %v704
  %v706 = vrot.slane %v705, 2
  %v707 = vadd.f32 %v705, %v706
  %v708 = vrot.slane %v707, 1
  %v709 = vadd.f32 %v707, %v708
  %s710 = vtos %v709
  %v711 = vstv %s710
  %v712 = vsel %vm686, %v591, 0.0
  %v713 = vsel %vm686, %v594, 0.0
  %v714 = vadd.f32 %v712, %v713
  %v715 = vsel %vm686, %v597, 0.0
  %v716 = vadd.f32 %v714, %v715
  %v717 = vsel %vm686, %v600, 0.0
  %v718 = vadd.f32 %v716, %v717
  %v719 = vsel %vm686, %v603, 0.0
  %v720 = vadd.f32 %v718, %v719
  %v721 = vsel %vm686, %v606, 0.0
  %v722 = vadd.f32 %v720, %v721
  %v723 = vsel %vm686, %v609, 0.0
  %v724 = vadd.f32 %v722, %v723
  %v725 = vsel %vm686, %v612, 0.0
  %v726 = vadd.f32 %v724, %v725
  %727 = vadd.xlane.f32.xlu0 %v726
  %v728 = vpop.xlane.xlu0 %727
  %v729 = vrot.slane %v728, 4
  %v730 = vadd.f32 %v728, %v729
  %v731 = vrot.slane %v730, 2
  %v732 = vadd.f32 %v730, %v731
  %v733 = vrot.slane %v732, 1
  %v734 = vadd.f32 %v732, %v733
  %s735 = vtos %v734
  %v736 = vstv %s735
  %v737 = vmax.f32 %v711, 1.0
  %v738 = vrcp.pop %v737
  %v739 = vmul.f32 1.0, %v738
  %v740 = vmax.f32 %v736, 1.0
  %v741 = vrcp.pop %v740
  %v742 = vmul.f32 1.0, %v741
  %v743 = vmax.f32 %v624, 0.0
  %v744 = vmax.f32 %v627, 0.0
  %v745 = vmax.f32 %v630, 0.0
  %v746 = vmax.f32 %v633, 0.0
  %v747 = vmax.f32 %v636, 0.0
  %v748 = vmax.f32 %v639, 0.0
  %v749 = vmax.f32 %v642, 0.0
  %v750 = vmax.f32 %v645, 0.0
  %v751 = vmul.f32 %v624, %v46
  %v752 = vmul.f32 %v627, %v47
  %v753 = vmul.f32 %v630, %v48
  %v754 = vmul.f32 %v633, %v49
  %v755 = vmul.f32 %v636, %v50
  %v756 = vmul.f32 %v639, %v51
  %v757 = vmul.f32 %v642, %v52
  %v758 = vmul.f32 %v645, %v53
  %v759 = vsub.f32 %v743, %v751
  %v760 = vsub.f32 %v744, %v752
  %v761 = vsub.f32 %v745, %v753
  %v762 = vsub.f32 %v746, %v754
  %v763 = vsub.f32 %v747, %v755
  %v764 = vsub.f32 %v748, %v756
  %v765 = vsub.f32 %v749, %v757
  %v766 = vsub.f32 %v750, %v758
  %v767 = vand.u32 2147483647, %v624
  %v768 = vand.u32 2147483647, %v627
  %v769 = vand.u32 2147483647, %v630
  %v770 = vand.u32 2147483647, %v633
  %v771 = vand.u32 2147483647, %v636
  %v772 = vand.u32 2147483647, %v639
  %v773 = vand.u32 2147483647, %v642
  %v774 = vand.u32 2147483647, %v645
  %v775 = vsub.f32 0.0, %v767
  %v776 = vsub.f32 0.0, %v768
  %v777 = vsub.f32 0.0, %v769
  %v778 = vsub.f32 0.0, %v770
  %v779 = vsub.f32 0.0, %v771
  %v780 = vsub.f32 0.0, %v772
  %v781 = vsub.f32 0.0, %v773
  %v782 = vsub.f32 0.0, %v774
  %v783 = vmul.f32 %v775, 1.442695
  %v784 = vpow.pop %v783
  %v785 = vmul.f32 %v776, 1.442695
  %v786 = vpow.pop %v785
  %v787 = vmul.f32 %v777, 1.442695
  %v788 = vpow.pop %v787
  %v789 = vmul.f32 %v778, 1.442695
  %v790 = vpow.pop %v789
  %v791 = vmul.f32 %v779, 1.442695
  %v792 = vpow.pop %v791
  %v793 = vmul.f32 %v780, 1.442695
  %v794 = vpow.pop %v793
  %v795 = vmul.f32 %v781, 1.442695
  %v796 = vpow.pop %v795
  %v797 = vmul.f32 %v782, 1.442695
  %v798 = vpow.pop %v797
  %v799 = vadd.f32 %v784, 1.0
  %v800 = vlog2.pop %v799
  %v801 = vmul.f32 %v800, 0.6931472
  %v802 = vmul.f32 -0.5, %v784
  %v803 = vadd.f32 %v802, 1.0
  %v804 = vmul.f32 %v803, %v784
  %v805 = vand.u32 2147483647, %v784
  %vm806 = vcmp.lt.f32.partialorder %v805, 0.0004427343
  %v807 = vsel %vm806, %v804, %v801
  %v808 = vadd.f32 %v786, 1.0
  %v809 = vlog2.pop %v808
  %v810 = vmul.f32 %v809, 0.6931472
  %v811 = vmul.f32 -0.5, %v786
  %v812 = vadd.f32 %v811, 1.0
  %v813 = vmul.f32 %v812, %v786
  %v814 = vand.u32 2147483647, %v786
  %vm815 = vcmp.lt.f32.partialorder %v814, 0.0004427343
  %v816 = vsel %vm815, %v813, %v810
  %v817 = vadd.f32 %v788, 1.0
  %v818 = vlog2.pop %v817
  %v819 = vmul.f32 %v818, 0.6931472
  %v820 = vmul.f32 -0.5, %v788
  %v821 = vadd.f32 %v820, 1.0
  %v822 = vmul.f32 %v821, %v788
  %v823 = vand.u32 2147483647, %v788
  %vm824 = vcmp.lt.f32.partialorder %v823, 0.0004427343
  %v825 = vsel %vm824, %v822, %v819
  %v826 = vadd.f32 %v790, 1.0
  %v827 = vlog2.pop %v826
  %v828 = vmul.f32 %v827, 0.6931472
  %v829 = vmul.f32 -0.5, %v790
  %v830 = vadd.f32 %v829, 1.0
  %v831 = vmul.f32 %v830, %v790
  %v832 = vand.u32 2147483647, %v790
  %vm833 = vcmp.lt.f32.partialorder %v832, 0.0004427343
  %v834 = vsel %vm833, %v831, %v828
  %v835 = vadd.f32 %v792, 1.0
  %v836 = vlog2.pop %v835
  %v837 = vmul.f32 %v836, 0.6931472
  %v838 = vmul.f32 -0.5, %v792
  %v839 = vadd.f32 %v838, 1.0
  %v840 = vmul.f32 %v839, %v792
  %v841 = vand.u32 2147483647, %v792
  %vm842 = vcmp.lt.f32.partialorder %v841, 0.0004427343
  %v843 = vsel %vm842, %v840, %v837
  %v844 = vadd.f32 %v794, 1.0
  %v845 = vlog2.pop %v844
  %v846 = vmul.f32 %v845, 0.6931472
  %v847 = vmul.f32 -0.5, %v794
  %v848 = vadd.f32 %v847, 1.0
  %v849 = vmul.f32 %v848, %v794
  %v850 = vand.u32 2147483647, %v794
  %vm851 = vcmp.lt.f32.partialorder %v850, 0.0004427343
  %v852 = vsel %vm851, %v849, %v846
  %v853 = vadd.f32 %v796, 1.0
  %v854 = vlog2.pop %v853
  %v855 = vmul.f32 %v854, 0.6931472
  %v856 = vmul.f32 -0.5, %v796
  %v857 = vadd.f32 %v856, 1.0
  %v858 = vmul.f32 %v857, %v796
  %v859 = vand.u32 2147483647, %v796
  %vm860 = vcmp.lt.f32.partialorder %v859, 0.0004427343
  %v861 = vsel %vm860, %v858, %v855
  %v862 = vadd.f32 %v798, 1.0
  %v863 = vlog2.pop %v862
  %v864 = vmul.f32 %v863, 0.6931472
  %v865 = vmul.f32 -0.5, %v798
  %v866 = vadd.f32 %v865, 1.0
  %v867 = vmul.f32 %v866, %v798
  %v868 = vand.u32 2147483647, %v798
  %vm869 = vcmp.lt.f32.partialorder %v868, 0.0004427343
  %v870 = vsel %vm869, %v867, %v864
  %v871 = vadd.f32 %v759, %v807
  %v872 = vadd.f32 %v760, %v816
  %v873 = vadd.f32 %v761, %v825
  %v874 = vadd.f32 %v762, %v834
  %v875 = vadd.f32 %v763, %v843
  %v876 = vadd.f32 %v764, %v852
  %v877 = vadd.f32 %v765, %v861
  %v878 = vadd.f32 %v766, %v870
  %v879 = vmul.f32 %v871, %v678
  %v880 = vmul.f32 %v872, %v679
  %v881 = vmul.f32 %v873, %v680
  %v882 = vmul.f32 %v874, %v681
  %v883 = vmul.f32 %v875, %v682
  %v884 = vmul.f32 %v876, %v683
  %v885 = vmul.f32 %v877, %v684
  %v886 = vmul.f32 %v878, %v685
  %v887 = vsel %vm686, %v879, 0.0
  %v888 = vsel %vm686, %v880, 0.0
  %v889 = vadd.f32 %v887, %v888
  %v890 = vsel %vm686, %v881, 0.0
  %v891 = vadd.f32 %v889, %v890
  %v892 = vsel %vm686, %v882, 0.0
  %v893 = vadd.f32 %v891, %v892
  %v894 = vsel %vm686, %v883, 0.0
  %v895 = vadd.f32 %v893, %v894
  %v896 = vsel %vm686, %v884, 0.0
  %v897 = vadd.f32 %v895, %v896
  %v898 = vsel %vm686, %v885, 0.0
  %v899 = vadd.f32 %v897, %v898
  %v900 = vsel %vm686, %v886, 0.0
  %v901 = vadd.f32 %v899, %v900
  %902 = vadd.xlane.f32.xlu0 %v901
  %v903 = vpop.xlane.xlu0 %902
  %v904 = vrot.slane %v903, 4
  %v905 = vadd.f32 %v903, %v904
  %v906 = vrot.slane %v905, 2
  %v907 = vadd.f32 %v905, %v906
  %v908 = vrot.slane %v907, 1
  %v909 = vadd.f32 %v907, %v908
  %s910 = vtos %v909
  %v911 = vstv %s910
  %v912 = vmul.f32 %v911, %v739
  %v913 = vmax.f32 %v656, 0.0
  %v914 = vmax.f32 %v659, 0.0
  %v915 = vmax.f32 %v662, 0.0
  %v916 = vmax.f32 %v665, 0.0
  %v917 = vmax.f32 %v668, 0.0
  %v918 = vmax.f32 %v671, 0.0
  %v919 = vmax.f32 %v674, 0.0
  %v920 = vmax.f32 %v677, 0.0
  %v921 = vmul.f32 %v656, %v46
  %v922 = vmul.f32 %v659, %v47
  %v923 = vmul.f32 %v662, %v48
  %v924 = vmul.f32 %v665, %v49
  %v925 = vmul.f32 %v668, %v50
  %v926 = vmul.f32 %v671, %v51
  %v927 = vmul.f32 %v674, %v52
  %v928 = vmul.f32 %v677, %v53
  %v929 = vsub.f32 %v913, %v921
  %v930 = vsub.f32 %v914, %v922
  %v931 = vsub.f32 %v915, %v923
  %v932 = vsub.f32 %v916, %v924
  %v933 = vsub.f32 %v917, %v925
  %v934 = vsub.f32 %v918, %v926
  %v935 = vsub.f32 %v919, %v927
  %v936 = vsub.f32 %v920, %v928
  %v937 = vand.u32 2147483647, %v656
  %v938 = vand.u32 2147483647, %v659
  %v939 = vand.u32 2147483647, %v662
  %v940 = vand.u32 2147483647, %v665
  %v941 = vand.u32 2147483647, %v668
  %v942 = vand.u32 2147483647, %v671
  %v943 = vand.u32 2147483647, %v674
  %v944 = vand.u32 2147483647, %v677
  %v945 = vsub.f32 0.0, %v937
  %v946 = vsub.f32 0.0, %v938
  %v947 = vsub.f32 0.0, %v939
  %v948 = vsub.f32 0.0, %v940
  %v949 = vsub.f32 0.0, %v941
  %v950 = vsub.f32 0.0, %v942
  %v951 = vsub.f32 0.0, %v943
  %v952 = vsub.f32 0.0, %v944
  %v953 = vmul.f32 %v945, 1.442695
  %v954 = vpow.pop %v953
  %v955 = vmul.f32 %v946, 1.442695
  %v956 = vpow.pop %v955
  %v957 = vmul.f32 %v947, 1.442695
  %v958 = vpow.pop %v957
  %v959 = vmul.f32 %v948, 1.442695
  %v960 = vpow.pop %v959
  %v961 = vmul.f32 %v949, 1.442695
  %v962 = vpow.pop %v961
  %v963 = vmul.f32 %v950, 1.442695
  %v964 = vpow.pop %v963
  %v965 = vmul.f32 %v951, 1.442695
  %v966 = vpow.pop %v965
  %v967 = vmul.f32 %v952, 1.442695
  %v968 = vpow.pop %v967
  %v969 = vadd.f32 %v954, 1.0
  %v970 = vlog2.pop %v969
  %v971 = vmul.f32 %v970, 0.6931472
  %v972 = vmul.f32 -0.5, %v954
  %v973 = vadd.f32 %v972, 1.0
  %v974 = vmul.f32 %v973, %v954
  %v975 = vand.u32 2147483647, %v954
  %vm976 = vcmp.lt.f32.partialorder %v975, 0.0004427343
  %v977 = vsel %vm976, %v974, %v971
  %v978 = vadd.f32 %v956, 1.0
  %v979 = vlog2.pop %v978
  %v980 = vmul.f32 %v979, 0.6931472
  %v981 = vmul.f32 -0.5, %v956
  %v982 = vadd.f32 %v981, 1.0
  %v983 = vmul.f32 %v982, %v956
  %v984 = vand.u32 2147483647, %v956
  %vm985 = vcmp.lt.f32.partialorder %v984, 0.0004427343
  %v986 = vsel %vm985, %v983, %v980
  %v987 = vadd.f32 %v958, 1.0
  %v988 = vlog2.pop %v987
  %v989 = vmul.f32 %v988, 0.6931472
  %v990 = vmul.f32 -0.5, %v958
  %v991 = vadd.f32 %v990, 1.0
  %v992 = vmul.f32 %v991, %v958
  %v993 = vand.u32 2147483647, %v958
  %vm994 = vcmp.lt.f32.partialorder %v993, 0.0004427343
  %v995 = vsel %vm994, %v992, %v989
  %v996 = vadd.f32 %v960, 1.0
  %v997 = vlog2.pop %v996
  %v998 = vmul.f32 %v997, 0.6931472
  %v999 = vmul.f32 -0.5, %v960
  %v1000 = vadd.f32 %v999, 1.0
  %v1001 = vmul.f32 %v1000, %v960
  %v1002 = vand.u32 2147483647, %v960
  %vm1003 = vcmp.lt.f32.partialorder %v1002, 0.0004427343
  %v1004 = vsel %vm1003, %v1001, %v998
  %v1005 = vadd.f32 %v962, 1.0
  %v1006 = vlog2.pop %v1005
  %v1007 = vmul.f32 %v1006, 0.6931472
  %v1008 = vmul.f32 -0.5, %v962
  %v1009 = vadd.f32 %v1008, 1.0
  %v1010 = vmul.f32 %v1009, %v962
  %v1011 = vand.u32 2147483647, %v962
  %vm1012 = vcmp.lt.f32.partialorder %v1011, 0.0004427343
  %v1013 = vsel %vm1012, %v1010, %v1007
  %v1014 = vadd.f32 %v964, 1.0
  %v1015 = vlog2.pop %v1014
  %v1016 = vmul.f32 %v1015, 0.6931472
  %v1017 = vmul.f32 -0.5, %v964
  %v1018 = vadd.f32 %v1017, 1.0
  %v1019 = vmul.f32 %v1018, %v964
  %v1020 = vand.u32 2147483647, %v964
  %vm1021 = vcmp.lt.f32.partialorder %v1020, 0.0004427343
  %v1022 = vsel %vm1021, %v1019, %v1016
  %v1023 = vadd.f32 %v966, 1.0
  %v1024 = vlog2.pop %v1023
  %v1025 = vmul.f32 %v1024, 0.6931472
  %v1026 = vmul.f32 -0.5, %v966
  %v1027 = vadd.f32 %v1026, 1.0
  %v1028 = vmul.f32 %v1027, %v966
  %v1029 = vand.u32 2147483647, %v966
  %vm1030 = vcmp.lt.f32.partialorder %v1029, 0.0004427343
  %v1031 = vsel %vm1030, %v1028, %v1025
  %v1032 = vadd.f32 %v968, 1.0
  %v1033 = vlog2.pop %v1032
  %v1034 = vmul.f32 %v1033, 0.6931472
  %v1035 = vmul.f32 -0.5, %v968
  %v1036 = vadd.f32 %v1035, 1.0
  %v1037 = vmul.f32 %v1036, %v968
  %v1038 = vand.u32 2147483647, %v968
  %vm1039 = vcmp.lt.f32.partialorder %v1038, 0.0004427343
  %v1040 = vsel %vm1039, %v1037, %v1034
  %v1041 = vadd.f32 %v929, %v977
  %v1042 = vadd.f32 %v930, %v986
  %v1043 = vadd.f32 %v931, %v995
  %v1044 = vadd.f32 %v932, %v1004
  %v1045 = vadd.f32 %v933, %v1013
  %v1046 = vadd.f32 %v934, %v1022
  %v1047 = vadd.f32 %v935, %v1031
  %v1048 = vadd.f32 %v936, %v1040
  %v1049 = vmul.f32 %v1041, %v591
  %v1050 = vmul.f32 %v1042, %v594
  %v1051 = vmul.f32 %v1043, %v597
  %v1052 = vmul.f32 %v1044, %v600
  %v1053 = vmul.f32 %v1045, %v603
  %v1054 = vmul.f32 %v1046, %v606
  %v1055 = vmul.f32 %v1047, %v609
  %v1056 = vmul.f32 %v1048, %v612
  %v1057 = vsel %vm686, %v1049, 0.0
  %v1058 = vsel %vm686, %v1050, 0.0
  %v1059 = vadd.f32 %v1057, %v1058
  %v1060 = vsel %vm686, %v1051, 0.0
  %v1061 = vadd.f32 %v1059, %v1060
  %v1062 = vsel %vm686, %v1052, 0.0
  %v1063 = vadd.f32 %v1061, %v1062
  %v1064 = vsel %vm686, %v1053, 0.0
  %v1065 = vadd.f32 %v1063, %v1064
  %v1066 = vsel %vm686, %v1054, 0.0
  %v1067 = vadd.f32 %v1065, %v1066
  %v1068 = vsel %vm686, %v1055, 0.0
  %v1069 = vadd.f32 %v1067, %v1068
  %v1070 = vsel %vm686, %v1056, 0.0
  %v1071 = vadd.f32 %v1069, %v1070
  %1072 = vadd.xlane.f32.xlu0 %v1071
  %v1073 = vpop.xlane.xlu0 %1072
  %v1074 = vrot.slane %v1073, 4
  %v1075 = vadd.f32 %v1073, %v1074
  %v1076 = vrot.slane %v1075, 2
  %v1077 = vadd.f32 %v1075, %v1076
  %v1078 = vrot.slane %v1077, 1
  %v1079 = vadd.f32 %v1077, %v1078
  %s1080 = vtos %v1079
  %v1081 = vstv %s1080
  %v1082 = vmul.f32 %v1081, %v742
  %v1083 = vxor.u32 %v624, 2147483648
  %v1084 = vxor.u32 %v627, 2147483648
  %v1085 = vxor.u32 %v630, 2147483648
  %v1086 = vxor.u32 %v633, 2147483648
  %v1087 = vxor.u32 %v636, 2147483648
  %v1088 = vxor.u32 %v639, 2147483648
  %v1089 = vxor.u32 %v642, 2147483648
  %v1090 = vxor.u32 %v645, 2147483648
  %v1091 = vmul.f32 %v1083, 1.442695
  %v1092 = vpow.pop %v1091
  %v1093 = vmul.f32 %v1084, 1.442695
  %v1094 = vpow.pop %v1093
  %v1095 = vmul.f32 %v1085, 1.442695
  %v1096 = vpow.pop %v1095
  %v1097 = vmul.f32 %v1086, 1.442695
  %v1098 = vpow.pop %v1097
  %v1099 = vmul.f32 %v1087, 1.442695
  %v1100 = vpow.pop %v1099
  %v1101 = vmul.f32 %v1088, 1.442695
  %v1102 = vpow.pop %v1101
  %v1103 = vmul.f32 %v1089, 1.442695
  %v1104 = vpow.pop %v1103
  %v1105 = vmul.f32 %v1090, 1.442695
  %v1106 = vpow.pop %v1105
  %v1107 = vadd.f32 %v1092, 1.0
  %v1108 = vadd.f32 %v1094, 1.0
  %v1109 = vadd.f32 %v1096, 1.0
  %v1110 = vadd.f32 %v1098, 1.0
  %v1111 = vadd.f32 %v1100, 1.0
  %v1112 = vadd.f32 %v1102, 1.0
  %v1113 = vadd.f32 %v1104, 1.0
  %v1114 = vadd.f32 %v1106, 1.0
  %v1115 = vrcp.pop %v1107
  %v1116 = vmul.f32 1.0, %v1115
  %v1117 = vrcp.pop %v1108
  %v1118 = vmul.f32 1.0, %v1117
  %v1119 = vrcp.pop %v1109
  %v1120 = vmul.f32 1.0, %v1119
  %v1121 = vrcp.pop %v1110
  %v1122 = vmul.f32 1.0, %v1121
  %v1123 = vrcp.pop %v1111
  %v1124 = vmul.f32 1.0, %v1123
  %v1125 = vrcp.pop %v1112
  %v1126 = vmul.f32 1.0, %v1125
  %v1127 = vrcp.pop %v1113
  %v1128 = vmul.f32 1.0, %v1127
  %v1129 = vrcp.pop %v1114
  %v1130 = vmul.f32 1.0, %v1129
  %v1131 = vsub.f32 %v1116, %v46
  %v1132 = vsub.f32 %v1118, %v47
  %v1133 = vsub.f32 %v1120, %v48
  %v1134 = vsub.f32 %v1122, %v49
  %v1135 = vsub.f32 %v1124, %v50
  %v1136 = vsub.f32 %v1126, %v51
  %v1137 = vsub.f32 %v1128, %v52
  %v1138 = vsub.f32 %v1130, %v53
  %v1139 = vand.u32 2147483647, %v1131
  %v1140 = vand.u32 2147483647, %v1132
  %v1141 = vand.u32 2147483647, %v1133
  %v1142 = vand.u32 2147483647, %v1134
  %v1143 = vand.u32 2147483647, %v1135
  %v1144 = vand.u32 2147483647, %v1136
  %v1145 = vand.u32 2147483647, %v1137
  %v1146 = vand.u32 2147483647, %v1138
  %v1147 = vmul.f32 %v1139, %v678
  %v1148 = vmul.f32 %v1140, %v679
  %v1149 = vmul.f32 %v1141, %v680
  %v1150 = vmul.f32 %v1142, %v681
  %v1151 = vmul.f32 %v1143, %v682
  %v1152 = vmul.f32 %v1144, %v683
  %v1153 = vmul.f32 %v1145, %v684
  %v1154 = vmul.f32 %v1146, %v685
  %v1155 = vsel %vm686, %v1147, 0.0
  %v1156 = vsel %vm686, %v1148, 0.0
  %v1157 = vadd.f32 %v1155, %v1156
  %v1158 = vsel %vm686, %v1149, 0.0
  %v1159 = vadd.f32 %v1157, %v1158
  %v1160 = vsel %vm686, %v1150, 0.0
  %v1161 = vadd.f32 %v1159, %v1160
  %v1162 = vsel %vm686, %v1151, 0.0
  %v1163 = vadd.f32 %v1161, %v1162
  %v1164 = vsel %vm686, %v1152, 0.0
  %v1165 = vadd.f32 %v1163, %v1164
  %v1166 = vsel %vm686, %v1153, 0.0
  %v1167 = vadd.f32 %v1165, %v1166
  %v1168 = vsel %vm686, %v1154, 0.0
  %v1169 = vadd.f32 %v1167, %v1168
  %1170 = vadd.xlane.f32.xlu0 %v1169
  %v1171 = vpop.xlane.xlu0 %1170
  %v1172 = vrot.slane %v1171, 4
  %v1173 = vadd.f32 %v1171, %v1172
  %v1174 = vrot.slane %v1173, 2
  %v1175 = vadd.f32 %v1173, %v1174
  %v1176 = vrot.slane %v1175, 1
  %v1177 = vadd.f32 %v1175, %v1176
  %s1178 = vtos %v1177
  %v1179 = vstv %s1178
  %v1180 = vmul.f32 %v1179, %v739
  %v1181 = vxor.u32 %v656, 2147483648
  %v1182 = vxor.u32 %v659, 2147483648
  %v1183 = vxor.u32 %v662, 2147483648
  %v1184 = vxor.u32 %v665, 2147483648
  %v1185 = vxor.u32 %v668, 2147483648
  %v1186 = vxor.u32 %v671, 2147483648
  %v1187 = vxor.u32 %v674, 2147483648
  %v1188 = vxor.u32 %v677, 2147483648
  %v1189 = vmul.f32 %v1181, 1.442695
  %v1190 = vpow.pop %v1189
  %v1191 = vmul.f32 %v1182, 1.442695
  %v1192 = vpow.pop %v1191
  %v1193 = vmul.f32 %v1183, 1.442695
  %v1194 = vpow.pop %v1193
  %v1195 = vmul.f32 %v1184, 1.442695
  %v1196 = vpow.pop %v1195
  %v1197 = vmul.f32 %v1185, 1.442695
  %v1198 = vpow.pop %v1197
  %v1199 = vmul.f32 %v1186, 1.442695
  %v1200 = vpow.pop %v1199
  %v1201 = vmul.f32 %v1187, 1.442695
  %v1202 = vpow.pop %v1201
  %v1203 = vmul.f32 %v1188, 1.442695
  %v1204 = vpow.pop %v1203
  %v1205 = vadd.f32 %v1190, 1.0
  %v1206 = vadd.f32 %v1192, 1.0
  %v1207 = vadd.f32 %v1194, 1.0
  %v1208 = vadd.f32 %v1196, 1.0
  %v1209 = vadd.f32 %v1198, 1.0
  %v1210 = vadd.f32 %v1200, 1.0
  %v1211 = vadd.f32 %v1202, 1.0
  %v1212 = vadd.f32 %v1204, 1.0
  %v1213 = vrcp.pop %v1205
  %v1214 = vmul.f32 1.0, %v1213
  %v1215 = vrcp.pop %v1206
  %v1216 = vmul.f32 1.0, %v1215
  %v1217 = vrcp.pop %v1207
  %v1218 = vmul.f32 1.0, %v1217
  %v1219 = vrcp.pop %v1208
  %v1220 = vmul.f32 1.0, %v1219
  %v1221 = vrcp.pop %v1209
  %v1222 = vmul.f32 1.0, %v1221
  %v1223 = vrcp.pop %v1210
  %v1224 = vmul.f32 1.0, %v1223
  %v1225 = vrcp.pop %v1211
  %v1226 = vmul.f32 1.0, %v1225
  %v1227 = vrcp.pop %v1212
  %v1228 = vmul.f32 1.0, %v1227
  %v1229 = vsub.f32 %v1214, %v46
  %v1230 = vsub.f32 %v1216, %v47
  %v1231 = vsub.f32 %v1218, %v48
  %v1232 = vsub.f32 %v1220, %v49
  %v1233 = vsub.f32 %v1222, %v50
  %v1234 = vsub.f32 %v1224, %v51
  %v1235 = vsub.f32 %v1226, %v52
  %v1236 = vsub.f32 %v1228, %v53
  %v1237 = vand.u32 2147483647, %v1229
  %v1238 = vand.u32 2147483647, %v1230
  %v1239 = vand.u32 2147483647, %v1231
  %v1240 = vand.u32 2147483647, %v1232
  %v1241 = vand.u32 2147483647, %v1233
  %v1242 = vand.u32 2147483647, %v1234
  %v1243 = vand.u32 2147483647, %v1235
  %v1244 = vand.u32 2147483647, %v1236
  %v1245 = vmul.f32 %v1237, %v591
  %v1246 = vmul.f32 %v1238, %v594
  %v1247 = vmul.f32 %v1239, %v597
  %v1248 = vmul.f32 %v1240, %v600
  %v1249 = vmul.f32 %v1241, %v603
  %v1250 = vmul.f32 %v1242, %v606
  %v1251 = vmul.f32 %v1243, %v609
  %v1252 = vmul.f32 %v1244, %v612
  %v1253 = vsel %vm686, %v1245, 0.0
  %v1254 = vsel %vm686, %v1246, 0.0
  %v1255 = vadd.f32 %v1253, %v1254
  %v1256 = vsel %vm686, %v1247, 0.0
  %v1257 = vadd.f32 %v1255, %v1256
  %v1258 = vsel %vm686, %v1248, 0.0
  %v1259 = vadd.f32 %v1257, %v1258
  %v1260 = vsel %vm686, %v1249, 0.0
  %v1261 = vadd.f32 %v1259, %v1260
  %v1262 = vsel %vm686, %v1250, 0.0
  %v1263 = vadd.f32 %v1261, %v1262
  %v1264 = vsel %vm686, %v1251, 0.0
  %v1265 = vadd.f32 %v1263, %v1264
  %v1266 = vsel %vm686, %v1252, 0.0
  %v1267 = vadd.f32 %v1265, %v1266
  %1268 = vadd.xlane.f32.xlu0 %v1267
  %v1269 = vpop.xlane.xlu0 %1268
  %v1270 = vrot.slane %v1269, 4
  %v1271 = vadd.f32 %v1269, %v1270
  %v1272 = vrot.slane %v1271, 2
  %v1273 = vadd.f32 %v1271, %v1272
  %v1274 = vrot.slane %v1273, 1
  %v1275 = vadd.f32 %v1273, %v1274
  %s1276 = vtos %v1275
  %v1277 = vstv %s1276
  %v1278 = vmul.f32 %v1277, %v742
  %v1279 = vlaneseq
  %v1280 = vshrl.u32 %v1279, 7
  %v1281 = vsub.s32 0, %v1280
  %v1282 = vrot.slane %v45, %v1281
  %vm1283 = vcmp.eq.s32.totalorder %v538, %v1282
  %vm1284 = vcmp.eq.s32.totalorder %v539, %v1282
  %vm1285 = vcmp.eq.s32.totalorder %v540, %v1282
  %vm1286 = vcmp.eq.s32.totalorder %v541, %v1282
  %vm1287 = vcmp.eq.s32.totalorder %v542, %v1282
  %vm1288 = vcmp.eq.s32.totalorder %v543, %v1282
  %v1289 = vsel %vm1283, 1, 0
  %v1290 = vsel %vm1284, 1, 0
  %v1291 = vsel %vm1285, 1, 0
  %v1292 = vsel %vm1286, 1, 0
  %v1293 = vsel %vm1287, 1, 0
  %v1294 = vsel %vm1288, 1, 0
  %v1295 = vcvt.s32.f32 %v1289
  %v1296 = vcvt.s32.f32 %v1290
  %v1297 = vcvt.s32.f32 %v1291
  %v1298 = vcvt.s32.f32 %v1292
  %v1299 = vcvt.s32.f32 %v1293
  %v1300 = vcvt.s32.f32 %v1294
  %v1301 = vsel %vm160, %v1295, -inf
  %1302 = vmax.xlane.f32.xlu0 %v1301
  %v1303 = vpop.xlane.xlu0 %1302
  %v1304 = vsel %vm160, %v1296, -inf
  %1305 = vmax.xlane.f32.xlu0 %v1304
  %v1306 = vpop.xlane.xlu0 %1305
  %v1307 = vsel %vm160, %v1297, -inf
  %1308 = vmax.xlane.f32.xlu0 %v1307
  %v1309 = vpop.xlane.xlu0 %1308
  %v1310 = vsel %vm160, %v1298, -inf
  %1311 = vmax.xlane.f32.xlu0 %v1310
  %v1312 = vpop.xlane.xlu0 %1311
  %v1313 = vsel %vm160, %v1299, -inf
  %1314 = vmax.xlane.f32.xlu0 %v1313
  %v1315 = vpop.xlane.xlu0 %1314
  %v1316 = vsel %vm160, %v1300, -inf
  %1317 = vmax.xlane.f32.xlu0 %v1316
  %v1318 = vpop.xlane.xlu0 %1317
  %v1319 = vsel %vm686, %v1303, 0.0
  %v1320 = vsel %vm686, %v1306, 0.0
  %v1321 = vadd.f32 %v1319, %v1320
  %v1322 = vsel %vm686, %v1309, 0.0
  %v1323 = vadd.f32 %v1321, %v1322
  %v1324 = vsel %vm686, %v1312, 0.0
  %v1325 = vadd.f32 %v1323, %v1324
  %v1326 = vsel %vm686, %v1315, 0.0
  %v1327 = vadd.f32 %v1325, %v1326
  %v1328 = vsel %vm686, %v1318, 0.0
  %v1329 = vadd.f32 %v1327, %v1328
  %1330 = vadd.xlane.f32.xlu0 %v1329
  %v1331 = vpop.xlane.xlu0 %1330
  %v1332 = vrot.slane %v1331, 4
  %v1333 = vadd.f32 %v1331, %v1332
  %v1334 = vrot.slane %v1333, 2
  %v1335 = vadd.f32 %v1333, %v1334
  %v1336 = vrot.slane %v1335, 1
  %v1337 = vadd.f32 %v1335, %v1336
  %s1338 = vtos %v1337
  %v1339 = vstv %s1338
  %v1340 = vsub.f32 %v290, %v426
  %v1341 = vsub.f32 %v291, %v427
  %v1342 = vsub.f32 %v292, %v428
  %v1343 = vsub.f32 %v293, %v429
  %v1344 = vsub.f32 %v294, %v430
  %v1345 = vsub.f32 %v295, %v431
  %v1346 = vmul.f32 %v1340, %v1340
  %v1347 = vmul.f32 %v1341, %v1341
  %v1348 = vmul.f32 %v1342, %v1342
  %v1349 = vmul.f32 %v1343, %v1343
  %v1350 = vmul.f32 %v1344, %v1344
  %v1351 = vmul.f32 %v1345, %v1345
  %v1352 = vmul.f32 %v1346, %v1303
  %v1353 = vmul.f32 %v1347, %v1306
  %v1354 = vmul.f32 %v1348, %v1309
  %v1355 = vmul.f32 %v1349, %v1312
  %v1356 = vmul.f32 %v1350, %v1315
  %v1357 = vmul.f32 %v1351, %v1318
  %v1358 = vsel %vm621, %v1352, 0.0
  %v1359 = vsel %vm621, %v1353, 0.0
  %v1360 = vadd.f32 %v1358, %v1359
  %v1361 = vsel %vm621, %v1354, 0.0
  %v1362 = vadd.f32 %v1360, %v1361
  %v1363 = vsel %vm621, %v1355, 0.0
  %v1364 = vadd.f32 %v1362, %v1363
  %v1365 = vsel %vm621, %v1356, 0.0
  %v1366 = vadd.f32 %v1364, %v1365
  %v1367 = vsel %vm621, %v1357, 0.0
  %v1368 = vadd.f32 %v1366, %v1367
  %1369 = vadd.xlane.f32.xlu0 %v1368
  %v1370 = vpop.xlane.xlu0 %1369
  %v1371 = vrot.slane %v1370, 4
  %v1372 = vadd.f32 %v1370, %v1371
  %v1373 = vrot.slane %v1372, 2
  %v1374 = vadd.f32 %v1372, %v1373
  %v1375 = vrot.slane %v1374, 1
  %v1376 = vadd.f32 %v1374, %v1375
  %s1377 = vtos %v1376
  %v1378 = vstv %s1377
  %v1379 = vmax.f32 %v1339, 1.0
  %v1380 = vmul.f32 %v1379, 32.0
  %v1381 = vrcp.pop %v1380
  %v1382 = vmul.f32 %v1378, %v1381
  %vm1383 = vcmp.eq.s32.totalorder %v55, 0
  %v1384 = vsel %vm1383, %v912, 0.0
  %vm1385 = vcmp.eq.s32.totalorder %v55, 1
  %v1386 = vsel %vm1385, %v1082, 0.0
  %v1387 = vadd.f32 %v1384, %v1386
  %vm1388 = vcmp.eq.s32.totalorder %v55, 2
  %v1389 = vsel %vm1388, %v1382, 0.0
  %v1390 = vadd.f32 %v1387, %v1389
  %vm1391 = vcmp.eq.s32.totalorder %v55, 3
  %v1392 = vsel %vm1391, %v1180, 0.0
  %v1393 = vadd.f32 %v1390, %v1392
  %vm1394 = vcmp.eq.s32.totalorder %v55, 4
  %v1395 = vsel %vm1394, %v1278, 0.0
  %v1396 = vadd.f32 %v1393, %v1395
  %1397 = vst [vmem:[%s8] sm:$0x1] %v1396
  // Predicated region
  $region34: #{cause_forward.1} parent=0 // pred_check
    _
  $region35: #{cause_forward.1} parent=0 // pred_check_branch
    %1399 = sbr.rel (0) target = $region37
  $region36: #{cause_forward.1} parent=0 // pred_region
    _
  $region37: #{cause_forward.1} parent=0 // pred_fallthru
    _
  // Predicated region
  $region38: #{cause_forward.1} parent=0 // pred_check
    _
  $region39: #{cause_forward.1} parent=0 // pred_check_branch
    %1401 = sbr.rel (0) target = $region41
  $region40: #{cause_forward.1} parent=0 // pred_region
    _
  $region41: #{cause_forward.1} parent=0 // pred_fallthru
    _

</llo_original>
